<compile_context>
chip_gen: v6e
topology: v6e:2x2x1
jax: 0.10.0
libtpu: 0.0.40
codegen_flags: <defaults>
</compile_context>

<pallas_src>
import functools

import jax
import jax.numpy as jnp
from jax.experimental import pallas as pl
from jax.experimental.pallas import tpu as pltpu


def _mlp_kernel(x_ref, w1_ref, b1_ref, w2_ref, b2_ref, o_ref):
    # x_ref:  (tm, Cin)
    # w1_ref: (Cin, H)    b1_ref: (1, H)
    # w2_ref: (H, Cout)   b2_ref: (1, Cout)
    x = x_ref[...]
    # fc1 (MXU, f32 accumulation)
    h = jnp.dot(x, w1_ref[...], preferred_element_type=jnp.float32)
    h = h + b1_ref[...].astype(jnp.float32)
    # exact GELU (erf formulation, matches torch.nn.GELU default), computed in f32
    h = 0.5 * h * (1.0 + jax.lax.erf(h * 0.7071067811865476))
    # fc2 (MXU, f32 accumulation); cast intermediate to the weight dtype (bf16 path)
    o = jnp.dot(h.astype(w2_ref.dtype), w2_ref[...],
                preferred_element_type=jnp.float32)
    o = o + b2_ref[...].astype(jnp.float32)
    o_ref[...] = o.astype(o_ref.dtype)


def _choose_tm(M):
    """Row-tile size: multiple of 256 when possible, and keep >= 2 grid steps so
    row tiles can shard across both v7x TensorCores."""
    if M >= 1024:
        return 512
    if M >= 512:
        return 256
    # small-token case: at most one or two tiles, keep the sublane-multiple-of-8 rule
    return max(8, min(256, ((M + 7) // 8) * 8))


@functools.partial(jax.jit, static_argnames=("tm",))
def mlp_pallas(x, w1, b1, w2, b2, *, tm=None):
    """x: (B, N, Cin). w1: (Cin, H), b1: (1, H), w2: (H, Cout), b2: (1, Cout).

    Returns (B, N, Cout). Weights are expected pre-transposed to (in, out)
    relative to torch.nn.Linear's (out, in) storage. For peak MXU throughput,
    pass x / w1 / w2 in bfloat16 (accumulation stays f32 inside the kernel).
    """
    B, N, Cin = x.shape
    H = w1.shape[1]
    Cout = w2.shape[1]
    M = B * N
    x2d = x.reshape(M, Cin)

    if tm is None:
        tm = _choose_tm(M)
    num_tiles = pl.cdiv(M, tm)          # partial last block handled by Pallas masking

    xb = jnp.dtype(x.dtype).itemsize
    wb = jnp.dtype(w1.dtype).itemsize
    ob = xb

    # VMEM budget: double-buffered x/out tiles, SINGLE-buffered resident weights and
    # biases, plus the f32 GELU slab and fc2 accumulator in compiler scratch.
    budget = (
        2 * tm * Cin * xb                 # x tiles (double-buffered)
        + 2 * tm * Cout * ob              # out tiles (double-buffered)
        + (Cin * H + H * Cout) * wb       # weights (single-buffered, Buffered(1))
        + (H + Cout) * wb                 # biases
        + tm * H * 4                      # f32 GELU intermediate
        + tm * Cout * 4                   # f32 fc2 accumulator
    )
    try:
        vmem_cap = int(pltpu.get_tpu_info().vmem_capacity_bytes)
    except Exception:
        vmem_cap = 64 * 2**20             # conservative (v7x per-TC VMEM)
    vmem_limit = int(min(max(1.25 * budget, 32 * 2**20), int(0.85 * vmem_cap)))

    cost = pl.CostEstimate(
        flops=2 * M * (Cin * H + H * Cout),
        transcendentals=M * H,
        bytes_accessed=(M * Cin * xb
                        + (Cin * H + H + H * Cout + Cout) * wb
                        + M * Cout * ob),
    )

    out2d = pl.pallas_call(
        _mlp_kernel,
        out_shape=jax.ShapeDtypeStruct((M, Cout), x.dtype),
        grid_spec=pltpu.PrefetchScalarGridSpec(
            num_scalar_prefetch=0,
            grid=(num_tiles,),
            in_specs=[
                pl.BlockSpec((tm, Cin), lambda i: (i, 0)),               # x (streamed)
                pl.BlockSpec((Cin, H), lambda i: (0, 0),
                             pipeline_mode=pl.Buffered(1)),              # w1 (resident)
                pl.BlockSpec((1, H), lambda i: (0, 0),
                             pipeline_mode=pl.Buffered(1)),              # b1
                pl.BlockSpec((H, Cout), lambda i: (0, 0),
                             pipeline_mode=pl.Buffered(1)),              # w2 (resident)
                pl.BlockSpec((1, Cout), lambda i: (0, 0),
                             pipeline_mode=pl.Buffered(1)),              # b2
            ],
            out_specs=pl.BlockSpec((tm, Cout), lambda i: (i, 0)),
        ),
        compiler_params=pltpu.CompilerParams(
            dimension_semantics=("parallel",),   # row tiles shard across v7x TCs
            vmem_limit_bytes=vmem_limit,
        ),
        cost_estimate=cost,
    )(x2d, w1, b1, w2, b2)

    return out2d.reshape(B, N, Cout)


def _reference_mlp(x, w1, b1, w2, b2):
    x = x.astype(jnp.float32)
    w1 = w1.astype(jnp.float32); b1 = b1.astype(jnp.float32)
    w2 = w2.astype(jnp.float32); b2 = b2.astype(jnp.float32)
    h = jnp.einsum("bnc,ch->bnh", x, w1, preferred_element_type=jnp.float32) + b1[0]
    h = 0.5 * h * (1.0 + jax.lax.erf(h / jnp.sqrt(2.0)))
    return jnp.einsum("bnh,ho->bno", h, w2, preferred_element_type=jnp.float32) + b2[0]


if __name__ == "__main__":
    # Small deterministic ViT-like config: 197 tokens (exercises the partial-block
    # path and gives 2 row tiles for megacore), lane-aligned feature dims.
    B, N, Cin, H, Cout = 2, 197, 128, 256, 128
    key = jax.random.PRNGKey(0)
    kx, k1, kb1, k2, kb2 = jax.random.split(key, 5)

    x = jax.random.normal(kx, (B, N, Cin), dtype=jnp.float32)
    # nn.Linear stores weight as (out, in); pre-transposed to (in, out) for the kernel.
    bound1 = 1.0 / jnp.sqrt(Cin)
    w1 = jax.random.uniform(k1, (Cin, H), minval=-bound1, maxval=bound1, dtype=jnp.float32)
    b1 = jax.random.uniform(kb1, (1, H), minval=-bound1, maxval=bound1, dtype=jnp.float32)
    bound2 = 1.0 / jnp.sqrt(H)
    w2 = jax.random.uniform(k2, (H, Cout), minval=-bound2, maxval=bound2, dtype=jnp.float32)
    b2 = jax.random.uniform(kb2, (1, Cout), minval=-bound2, maxval=bound2, dtype=jnp.float32)

    # ---- f32 path (matches torch.nn reference numerics) ----
    out = mlp_pallas(x, w1, b1, w2, b2)
    jax.block_until_ready(out)
    ref = _reference_mlp(x, w1, b1, w2, b2)
    assert out.shape == (B, N, Cout)
    assert jnp.allclose(out, ref, atol=2e-4, rtol=2e-4), "f32 mismatch vs reference"

    # ---- bf16 MXU path (peak-throughput configuration; f32 accumulation) ----
    xb16 = x.astype(jnp.bfloat16)
    w1b, b1b = w1.astype(jnp.bfloat16), b1.astype(jnp.bfloat16)
    w2b, b2b = w2.astype(jnp.bfloat16), b2.astype(jnp.bfloat16)
    out_bf16 = mlp_pallas(xb16, w1b, b1b, w2b, b2b)
    jax.block_until_ready(out_bf16)
    ref_bf16 = _reference_mlp(xb16, w1b, b1b, w2b, b2b)  # same bf16-rounded inputs, f32 math
    assert jnp.allclose(out_bf16.astype(jnp.float32), ref_bf16,
                        atol=3e-2, rtol=3e-2), "bf16 mismatch vs reference"

    print("KERNEL_OK")
</pallas_src>

<mosaic_0001>
module attributes {stable_mosaic.version = 11 : i64} {
  func.func @_mlp_kernel(%arg0: i32, %arg1: memref<256x128xf32, #tpu.memory_space<vmem>>, %arg2: memref<128x256xf32, #tpu.memory_space<vmem>>, %arg3: memref<1x256xf32, #tpu.memory_space<vmem>>, %arg4: memref<256x128xf32, #tpu.memory_space<vmem>>, %arg5: memref<1x128xf32, #tpu.memory_space<vmem>>, %arg6: memref<256x128xf32, #tpu.memory_space<vmem>>) attributes {dimension_semantics = [#tpu.dimension_semantics<parallel>], iteration_bounds = array<i64: 2>, scalar_prefetch = 0 : i64, scratch_operands = 0 : i64, tpu.core_type = #tpu.core_type<tc>, window_params = [{transform_indices = @transform_0, window_bounds = array<i64: 256, 128>}, {pipeline_mode = #tpu.pipeline_mode<synchronous>, transform_indices = @transform_1, window_bounds = array<i64: 128, 256>}, {pipeline_mode = #tpu.pipeline_mode<synchronous>, transform_indices = @transform_2, window_bounds = array<i64: 1, 256>}, {pipeline_mode = #tpu.pipeline_mode<synchronous>, transform_indices = @transform_3, window_bounds = array<i64: 256, 128>}, {pipeline_mode = #tpu.pipeline_mode<synchronous>, transform_indices = @transform_4, window_bounds = array<i64: 1, 128>}, {transform_indices = @transform_5, window_bounds = array<i64: 256, 128>}]} {
    %c0 = arith.constant 0 : index
    %c0_0 = arith.constant 0 : index
    %0 = vector.load %arg1[%c0, %c0_0] : memref<256x128xf32, #tpu.memory_space<vmem>>, vector<256x128xf32>
    %c0_1 = arith.constant 0 : index
    %c0_2 = arith.constant 0 : index
    %1 = vector.load %arg2[%c0_1, %c0_2] : memref<128x256xf32, #tpu.memory_space<vmem>>, vector<128x256xf32>
    %cst = arith.constant dense<0.000000e+00> : vector<256x256xf32>
    %2 = tpu.matmul %0, %1, %cst {dimension_numbers = #tpu.dot_dimension_numbers<[1], [0], [0], [1], [0, 0, 1, 1], [], []>} : vector<256x128xf32>, vector<128x256xf32>, vector<256x256xf32> -> vector<256x256xf32>
    %c0_3 = arith.constant 0 : index
    %c0_4 = arith.constant 0 : index
    %3 = vector.load %arg3[%c0_3, %c0_4] : memref<1x256xf32, #tpu.memory_space<vmem>>, vector<1x256xf32>
    %4 = vector.broadcast %3 : vector<1x256xf32> to vector<256x256xf32>
    %5 = arith.addf %2, %4 : vector<256x256xf32>
    %cst_5 = arith.constant 5.000000e-01 : f32
    %6 = vector.broadcast %cst_5 : f32 to vector<256x256xf32>
    %7 = arith.mulf %6, %5 : vector<256x256xf32>
    %cst_6 = arith.constant 0.707106769 : f32
    %8 = vector.broadcast %cst_6 : f32 to vector<256x256xf32>
    %9 = arith.mulf %5, %8 : vector<256x256xf32>
    %10 = math.erf %9 : vector<256x256xf32>
    %cst_7 = arith.constant 1.000000e+00 : f32
    %11 = vector.broadcast %cst_7 : f32 to vector<256x256xf32>
    %12 = arith.addf %11, %10 : vector<256x256xf32>
    %13 = arith.mulf %7, %12 : vector<256x256xf32>
    %c0_8 = arith.constant 0 : index
    %c0_9 = arith.constant 0 : index
    %14 = vector.load %arg4[%c0_8, %c0_9] : memref<256x128xf32, #tpu.memory_space<vmem>>, vector<256x128xf32>
    %cst_10 = arith.constant dense<0.000000e+00> : vector<256x128xf32>
    %15 = tpu.matmul %13, %14, %cst_10 {dimension_numbers = #tpu.dot_dimension_numbers<[1], [0], [0], [1], [0, 0, 1, 1], [], []>} : vector<256x256xf32>, vector<256x128xf32>, vector<256x128xf32> -> vector<256x128xf32>
    %c0_11 = arith.constant 0 : index
    %c0_12 = arith.constant 0 : index
    %16 = vector.load %arg5[%c0_11, %c0_12] : memref<1x128xf32, #tpu.memory_space<vmem>>, vector<1x128xf32>
    %17 = vector.broadcast %16 : vector<1x128xf32> to vector<256x128xf32>
    %18 = arith.addf %15, %17 : vector<256x128xf32>
    %c0_13 = arith.constant 0 : index
    %c0_14 = arith.constant 0 : index
    %19 = vector.load %arg6[%c0_13, %c0_14] : memref<256x128xf32, #tpu.memory_space<vmem>>, vector<256x128xf32>
    tpu.vector_store %arg6[%c0_13, %c0_14], %18 {strides = array<i32>} : memref<256x128xf32, #tpu.memory_space<vmem>>, vector<256x128xf32>,
    return
  }
  func.func @transform_0(%arg0: i32) -> (i32, i32) {
    %c0_i32 = arith.constant 0 : i32
    %c0_i32_0 = arith.constant 0 : i32
    return %arg0, %c0_i32 : i32, i32
  }
  func.func @transform_1(%arg0: i32) -> (i32, i32) {
    %c0_i32 = arith.constant 0 : i32
    %c0_i32_0 = arith.constant 0 : i32
    %c0_i32_1 = arith.constant 0 : i32
    return %c0_i32, %c0_i32_0 : i32, i32
  }
  func.func @transform_2(%arg0: i32) -> (i32, i32) {
    %c0_i32 = arith.constant 0 : i32
    %c0_i32_0 = arith.constant 0 : i32
    %c0_i32_1 = arith.constant 0 : i32
    return %c0_i32, %c0_i32_0 : i32, i32
  }
  func.func @transform_3(%arg0: i32) -> (i32, i32) {
    %c0_i32 = arith.constant 0 : i32
    %c0_i32_0 = arith.constant 0 : i32
    %c0_i32_1 = arith.constant 0 : i32
    return %c0_i32, %c0_i32_0 : i32, i32
  }
  func.func @transform_4(%arg0: i32) -> (i32, i32) {
    %c0_i32 = arith.constant 0 : i32
    %c0_i32_0 = arith.constant 0 : i32
    %c0_i32_1 = arith.constant 0 : i32
    return %c0_i32, %c0_i32_0 : i32, i32
  }
  func.func @transform_5(%arg0: i32) -> (i32, i32) {
    %c0_i32 = arith.constant 0 : i32
    %c0_i32_0 = arith.constant 0 : i32
    return %arg0, %c0_i32 : i32, i32
  }
}

</mosaic_0001>

<llo_original>
// kernel: mlp_pallas.1
$region0: #{mlp_pallas.1}
  #allocation0 [shape = 'u32[]', space=smem, size = 0x4, offset = 0x4, fixed_abs, tag = 'smem constant byte address 0x4 - core index']
  #allocation1 [shape = 'u32[144,128]{1,0:T(1,128)}', space=vmem, size = 0x12000, scoped, tag = 'internal scratch']
  %s0 = inlined_call_operand.vmem [shape: f32[394,128], index: 0, kind: input, shape index: {}]
  %s1 = inlined_call_operand.vmem [shape: f32[128,256], index: 1, kind: input, shape index: {}]
  %s2 = inlined_call_operand.vmem [shape: f32[1,256], index: 2, kind: input, shape index: {}]
  %s3 = inlined_call_operand.vmem [shape: f32[256,128], index: 3, kind: input, shape index: {}]
  %s4 = inlined_call_operand.vmem [shape: f32[1,128], index: 4, kind: input, shape index: {}]
  %s5 = inlined_call_operand.vmem [shape: f32[394,128], index: 5, kind: output, shape index: {}]
  %s6 = sld [smem:[#allocation0]]
  $region101: #{mlp_pallas.1} parent=0
    _
  %s8 = ssub.s32 1, %s6
  %s9 = scalar_select 0, %s8, %s6
  $region1: #{mlp_pallas.1} parent=0
    #allocation2 [shape = 'u8[262144]{0}', space=vmem, size = 0x40000, scoped, tag = 'output window, operand 0']
    loop: start=0, step=1, limit=4
    $region2: #{mlp_pallas.1} parent=1 // loop_pre_header
      _
    $region3: #{mlp_pallas.1} parent=1 // loop_header
      %s11 = sphi 0, %s15
      %p12 = scmp.ge.s32.totalorder %s11, 4
      %s21 = sphi 0, %s23
      %s24 = sphi 0, %s21
      %s25 = sphi 0, %s24
      %s41 = sphi 0, %s25
      %s45 = sphi 0, %s45
      %s47 = sphi 0, %s45
      %s48 = sphi 0, %s47
      %s62 = sphi 0, %s48
      %s66 = sphi 0, %s66
      %s68 = sphi 0, %s66
      %s69 = sphi 0, %s68
      %s83 = sphi 0, %s69
      %s87 = sphi 0, %s87
      %s89 = sphi 0, %s87
      %s90 = sphi 0, %s89
      %s104 = sphi 0, %s90
      %s108 = sphi 0, %s108
      %s110 = sphi 0, %s108
      %s111 = sphi 0, %s110
      %s125 = sphi 0, %s111
      %s131 = sphi 0, %s133
      %s134 = sphi 0, %s131
      %s135 = sphi 0, %s134
      %s151 = sphi 0, %s135
    $region4: #{mlp_pallas.1} parent=1 // loop_header_branch
      %14 = sbr.rel (%p12) target = $region8
    $region5: #{mlp_pallas.1} parent=1 // loop_body
      %s16 = ssub.s32 %s11, 1
      %s17 = ssub.s32 %s11, 2
      %s18 = sadd.s32 %s11, 1
      %s19 = ssub.s32 %s11, %s18
      %p20 = scmp.eq.s32.totalorder %s19, 0
      %s22 = sadd.s32 %s21, 1
      %s23 = scalar_select %p20, %s21, %s22
      %p26 = pneg %p20
      %p27 = scmp.eq.s32.totalorder %s11, 1
      %p28 = por %p26, %p27
      %p29 = scmp.ne.s32.totalorder %s21, %s24
      %p30 = scmp.eq.s32.totalorder %s11, 0
      %p31 = por %p29, %p30
      %p32 = scmp.ne.s32.totalorder %s21, %s24
      %p33 = scmp.eq.s32.totalorder %s16, 1
      %p34 = por %p32, %p33
      %p35 = scmp.ne.s32.totalorder %s24, %s25
      %p36 = scmp.eq.s32.totalorder %s16, 0
      %p37 = por %p35, %p36
      %p38 = scmp.ne.s32.totalorder %s24, %s25
      %p39 = scmp.eq.s32.totalorder %s17, 1
      %p40 = por %p38, %p39
      %p42 = scmp.ne.s32.totalorder %s25, %s41
      %p43 = scmp.eq.s32.totalorder %s17, 0
      %p44 = por %p42, %p43
      %s46 = sadd.s32 %s45, 1
      %p49 = scmp.eq.s32.totalorder %s11, 1
      %p50 = scmp.ne.s32.totalorder %s45, %s47
      %p51 = scmp.eq.s32.totalorder %s11, 0
      %p52 = por %p50, %p51
      %p53 = scmp.ne.s32.totalorder %s45, %s47
      %p54 = scmp.eq.s32.totalorder %s16, 1
      %p55 = por %p53, %p54
      %p56 = scmp.ne.s32.totalorder %s47, %s48
      %p57 = scmp.eq.s32.totalorder %s16, 0
      %p58 = por %p56, %p57
      %p59 = scmp.ne.s32.totalorder %s47, %s48
      %p60 = scmp.eq.s32.totalorder %s17, 1
      %p61 = por %p59, %p60
      %p63 = scmp.ne.s32.totalorder %s48, %s62
      %p64 = scmp.eq.s32.totalorder %s17, 0
      %p65 = por %p63, %p64
      %s67 = sadd.s32 %s66, 1
      %p70 = scmp.eq.s32.totalorder %s11, 1
      %p71 = scmp.ne.s32.totalorder %s66, %s68
      %p72 = scmp.eq.s32.totalorder %s11, 0
      %p73 = por %p71, %p72
      %p74 = scmp.ne.s32.totalorder %s66, %s68
      %p75 = scmp.eq.s32.totalorder %s16, 1
      %p76 = por %p74, %p75
      %p77 = scmp.ne.s32.totalorder %s68, %s69
      %p78 = scmp.eq.s32.totalorder %s16, 0
      %p79 = por %p77, %p78
      %p80 = scmp.ne.s32.totalorder %s68, %s69
      %p81 = scmp.eq.s32.totalorder %s17, 1
      %p82 = por %p80, %p81
      %p84 = scmp.ne.s32.totalorder %s69, %s83
      %p85 = scmp.eq.s32.totalorder %s17, 0
      %p86 = por %p84, %p85
      %s88 = sadd.s32 %s87, 1
      %p91 = scmp.eq.s32.totalorder %s11, 1
      %p92 = scmp.ne.s32.totalorder %s87, %s89
      %p93 = scmp.eq.s32.totalorder %s11, 0
      %p94 = por %p92, %p93
      %p95 = scmp.ne.s32.totalorder %s87, %s89
      %p96 = scmp.eq.s32.totalorder %s16, 1
      %p97 = por %p95, %p96
      %p98 = scmp.ne.s32.totalorder %s89, %s90
      %p99 = scmp.eq.s32.totalorder %s16, 0
      %p100 = por %p98, %p99
      %p101 = scmp.ne.s32.totalorder %s89, %s90
      %p102 = scmp.eq.s32.totalorder %s17, 1
      %p103 = por %p101, %p102
      %p105 = scmp.ne.s32.totalorder %s90, %s104
      %p106 = scmp.eq.s32.totalorder %s17, 0
      %p107 = por %p105, %p106
      %s109 = sadd.s32 %s108, 1
      %p112 = scmp.eq.s32.totalorder %s11, 1
      %p113 = scmp.ne.s32.totalorder %s108, %s110
      %p114 = scmp.eq.s32.totalorder %s11, 0
      %p115 = por %p113, %p114
      %p116 = scmp.ne.s32.totalorder %s108, %s110
      %p117 = scmp.eq.s32.totalorder %s16, 1
      %p118 = por %p116, %p117
      %p119 = scmp.ne.s32.totalorder %s110, %s111
      %p120 = scmp.eq.s32.totalorder %s16, 0
      %p121 = por %p119, %p120
      %p122 = scmp.ne.s32.totalorder %s110, %s111
      %p123 = scmp.eq.s32.totalorder %s17, 1
      %p124 = por %p122, %p123
      %p126 = scmp.ne.s32.totalorder %s111, %s125
      %p127 = scmp.eq.s32.totalorder %s17, 0
      %p128 = por %p126, %p127
      %s129 = ssub.s32 %s11, %s18
      %p130 = scmp.eq.s32.totalorder %s129, 0
      %s132 = sadd.s32 %s131, 1
      %s133 = scalar_select %p130, %s131, %s132
      %p136 = pneg %p130
      %p137 = scmp.eq.s32.totalorder %s11, 1
      %p138 = por %p136, %p137
      %p139 = scmp.ne.s32.totalorder %s131, %s134
      %p140 = scmp.eq.s32.totalorder %s11, 0
      %p141 = por %p139, %p140
      %p142 = scmp.ne.s32.totalorder %s131, %s134
      %p143 = scmp.eq.s32.totalorder %s16, 1
      %p144 = por %p142, %p143
      %p145 = scmp.ne.s32.totalorder %s134, %s135
      %p146 = scmp.eq.s32.totalorder %s16, 0
      %p147 = por %p145, %p146
      %p148 = scmp.ne.s32.totalorder %s134, %s135
      %p149 = scmp.eq.s32.totalorder %s17, 1
      %p150 = por %p148, %p149
      %p152 = scmp.ne.s32.totalorder %s135, %s151
      %p153 = scmp.eq.s32.totalorder %s17, 0
      %p154 = por %p152, %p153
      %p155 = scmp.le.s32.totalorder 1, %s11
      %p156 = scmp.lt.s32.totalorder %s11, 3
      %p157 = pnand %p155, %p156
      %p158 = pneg %p157
      // Predicated region
      $region9: #{mlp_pallas.1} parent=5 // pred_check
        _
      $region10: #{mlp_pallas.1} parent=5 // pred_check_branch
        %160 = sbr.rel (%p157) target = $region12
      $region11: #{mlp_pallas.1} parent=5 // pred_region
        %s161 = ssub.s32 %s11, 1
        // Predicated region
        $region13: #{mlp_pallas.1} parent=11 // pred_check
          %p162 = pneg %p58
        $region14: #{mlp_pallas.1} parent=11 // pred_check_branch
          %164 = sbr.rel (%p162) target = $region16
        $region15: #{mlp_pallas.1} parent=11 // pred_region
          _
        $region16: #{mlp_pallas.1} parent=11 // pred_fallthru
          _
        // Predicated region
        $region17: #{mlp_pallas.1} parent=11 // pred_check
          %p165 = pneg %p79
        $region18: #{mlp_pallas.1} parent=11 // pred_check_branch
          %167 = sbr.rel (%p165) target = $region20
        $region19: #{mlp_pallas.1} parent=11 // pred_region
          _
        $region20: #{mlp_pallas.1} parent=11 // pred_fallthru
          _
        // Predicated region
        $region21: #{mlp_pallas.1} parent=11 // pred_check
          %p168 = pneg %p100
        $region22: #{mlp_pallas.1} parent=11 // pred_check_branch
          %170 = sbr.rel (%p168) target = $region24
        $region23: #{mlp_pallas.1} parent=11 // pred_region
          _
        $region24: #{mlp_pallas.1} parent=11 // pred_fallthru
          _
        // Predicated region
        $region25: #{mlp_pallas.1} parent=11 // pred_check
          %p171 = pneg %p121
        $region26: #{mlp_pallas.1} parent=11 // pred_check_branch
          %173 = sbr.rel (%p171) target = $region28
        $region27: #{mlp_pallas.1} parent=11 // pred_region
          _
        $region28: #{mlp_pallas.1} parent=11 // pred_fallthru
          _
      $region12: #{mlp_pallas.1} parent=5 // pred_fallthru
        _
      %p174 = scmp.lt.s32.totalorder %s11, 2
      // Predicated region
      $region29: #{mlp_pallas.1} parent=5 // pred_check
        %p175 = pneg %p174
      $region30: #{mlp_pallas.1} parent=5 // pred_check_branch
        %177 = sbr.rel (%p175) target = $region32
      $region31: #{mlp_pallas.1} parent=5 // pred_region
        // Predicated region
        $region33: #{mlp_pallas.1} parent=31 // pred_check
          %p178 = pneg %p31
        $region34: #{mlp_pallas.1} parent=31 // pred_check_branch
          %180 = sbr.rel (%p178) target = $region36
        $region35: #{mlp_pallas.1} parent=31 // pred_region
          %s181 = smul.u32 32, %s11
          %s182 = ssub.s32 50, %s181
          %p183 = scmp.lt.s32.totalorder %s182, 32
          %s184 = scalar_select %p183, %s182, 32
          %s185 = smul.u32 128, %s184
          %p186 = scmp.lt.s32.totalorder %s181, 49
          %s187 = scalar_select %p186, %s181, 49
          %s188 = smul.addr %s187, 8
          %s189 = scalar_lea.vmem %s0, %s188
          %s190 = smul.u32 32, %s11
          %s191 = ssub.s32 50, %s190
          %p192 = scmp.lt.s32.totalorder %s191, 32
          %s193 = scalar_select %p192, %s191, 32
          %s194 = smul.u32 128, %s193
        $region36: #{mlp_pallas.1} parent=31 // pred_fallthru
          _
      $region32: #{mlp_pallas.1} parent=5 // pred_fallthru
        _
      %p195 = scmp.le.s32.totalorder 1, %s11
      %p196 = scmp.lt.s32.totalorder %s11, 3
      %p197 = pnand %p195, %p196
      %p198 = pneg %p197
      // Predicated region
      $region37: #{mlp_pallas.1} parent=5 // pred_check
        _
      $region38: #{mlp_pallas.1} parent=5 // pred_check_branch
        %200 = sbr.rel (%p197) target = $region40
      $region39: #{mlp_pallas.1} parent=5 // pred_region
        %s201 = ssub.s32 %s11, 1
        %s202 = smul.u32 32, %s16
        %s203 = ssub.s32 50, %s202
        %p204 = scmp.lt.s32.totalorder %s203, 32
        %s205 = scalar_select %p204, %s203, 32
        %s206 = smul.u32 128, %s205
        %p207 = scmp.lt.s32.totalorder %s202, 49
        %s208 = scalar_select %p207, %s202, 49
        %s209 = smul.addr %s208, 8
        %s210 = scalar_lea.vmem %s0, %s209
        %p211 = pneg %p37
        %p212 = pneg %p34
        %p213 = pneg %p58
        %p214 = pneg %p55
        %p215 = pneg %p79
        %p216 = pneg %p76
        %p217 = pneg %p100
        %p218 = pneg %p97
        %p219 = pneg %p121
        %p220 = pneg %p118
        %p221 = pneg %p147
        %p222 = pneg %p144
        %s223 = sand.u32 %s134, 1
        %s224 = sand.u32 %s134, 1
        %s225 = smul.addr %s224, 256
        %s226 = scalar_lea.vmem [#allocation2], %s225
        %s227 = smul.u32 32, %s16
        %s228 = ssub.s32 50, %s227
        %p229 = scmp.lt.s32.totalorder %s228, 32
        %s230 = scalar_select %p229, %s228, 32
        %s231 = smul.u32 128, %s230
        %p232 = scmp.lt.s32.totalorder %s227, 49
        %s233 = scalar_select %p232, %s227, 49
        %s234 = smul.addr %s233, 8
        %s235 = scalar_lea.vmem %s0, %s234
        %s236 = smul.u32 32, %s16
        %s237 = ssub.s32 50, %s236
        %p238 = scmp.lt.s32.totalorder %s237, 32
        %s239 = scalar_select %p238, %s237, 32
        %s240 = smul.u32 128, %s239
        %s241 = smul.u32 32, %s16
        %s242 = ssub.s32 50, %s241
        %p243 = scmp.lt.s32.totalorder %s242, 32
        %s244 = scalar_select %p243, %s242, 32
        %s245 = smul.u32 128, %s244
        %v246 = vld [vmem:[%s235] sm:$0xff]
        %v247 = vld [vmem:[%s235 + $0x8] sm:$0xff]
        %v248 = vld [vmem:[%s235 + $0x10] sm:$0xff]
        %v249 = vld [vmem:[%s235 + $0x18] sm:$0xff]
        %v250 = vld [vmem:[%s235 + $0x20] sm:$0xff]
        %v251 = vld [vmem:[%s235 + $0x28] sm:$0xff]
        %v252 = vld [vmem:[%s235 + $0x30] sm:$0xff]
        %v253 = vld [vmem:[%s235 + $0x38] sm:$0xff]
        %v254 = vld [vmem:[%s235 + $0x40] sm:$0xff]
        %v255 = vld [vmem:[%s235 + $0x48] sm:$0xff]
        %v256 = vld [vmem:[%s235 + $0x50] sm:$0xff]
        %v257 = vld [vmem:[%s235 + $0x58] sm:$0xff]
        %v258 = vld [vmem:[%s235 + $0x60] sm:$0xff]
        %v259 = vld [vmem:[%s235 + $0x68] sm:$0xff]
        %v260 = vld [vmem:[%s235 + $0x70] sm:$0xff]
        %v261 = vld [vmem:[%s235 + $0x78] sm:$0xff]
        %v262 = vld [vmem:[%s235 + $0x80] sm:$0xff]
        %v263 = vld [vmem:[%s235 + $0x88] sm:$0xff]
        %v264 = vld [vmem:[%s235 + $0x90] sm:$0xff]
        %v265 = vld [vmem:[%s235 + $0x98] sm:$0xff]
        %v266 = vld [vmem:[%s235 + $0xa0] sm:$0xff]
        %v267 = vld [vmem:[%s235 + $0xa8] sm:$0xff]
        %v268 = vld [vmem:[%s235 + $0xb0] sm:$0xff]
        %v269 = vld [vmem:[%s235 + $0xb8] sm:$0xff]
        %v270 = vld [vmem:[%s235 + $0xc0] sm:$0xff]
        %v271 = vld [vmem:[%s235 + $0xc8] sm:$0xff]
        %v272 = vld [vmem:[%s235 + $0xd0] sm:$0xff]
        %v273 = vld [vmem:[%s235 + $0xd8] sm:$0xff]
        %v274 = vld [vmem:[%s235 + $0xe0] sm:$0xff]
        %v275 = vld [vmem:[%s235 + $0xe8] sm:$0xff]
        %v276 = vld [vmem:[%s235 + $0xf0] sm:$0xff]
        %v277 = vld [vmem:[%s235 + $0xf8] sm:$0xff]
        %v278 = vld [vmem:[%s1] sm:$0xff]
        %v279 = vld [vmem:[%s1 + $0x8] sm:$0xff]
        %v280 = vld [vmem:[%s1 + $0x10] sm:$0xff]
        %v281 = vld [vmem:[%s1 + $0x18] sm:$0xff]
        %v282 = vld [vmem:[%s1 + $0x20] sm:$0xff]
        %v283 = vld [vmem:[%s1 + $0x28] sm:$0xff]
        %v284 = vld [vmem:[%s1 + $0x30] sm:$0xff]
        %v285 = vld [vmem:[%s1 + $0x38] sm:$0xff]
        %v286 = vld [vmem:[%s1 + $0x40] sm:$0xff]
        %v287 = vld [vmem:[%s1 + $0x48] sm:$0xff]
        %v288 = vld [vmem:[%s1 + $0x50] sm:$0xff]
        %v289 = vld [vmem:[%s1 + $0x58] sm:$0xff]
        %v290 = vld [vmem:[%s1 + $0x60] sm:$0xff]
        %v291 = vld [vmem:[%s1 + $0x68] sm:$0xff]
        %v292 = vld [vmem:[%s1 + $0x70] sm:$0xff]
        %v293 = vld [vmem:[%s1 + $0x78] sm:$0xff]
        %v294 = vld [vmem:[%s1 + $0x80] sm:$0xff]
        %v295 = vld [vmem:[%s1 + $0x88] sm:$0xff]
        %v296 = vld [vmem:[%s1 + $0x90] sm:$0xff]
        %v297 = vld [vmem:[%s1 + $0x98] sm:$0xff]
        %v298 = vld [vmem:[%s1 + $0xa0] sm:$0xff]
        %v299 = vld [vmem:[%s1 + $0xa8] sm:$0xff]
        %v300 = vld [vmem:[%s1 + $0xb0] sm:$0xff]
        %v301 = vld [vmem:[%s1 + $0xb8] sm:$0xff]
        %v302 = vld [vmem:[%s1 + $0xc0] sm:$0xff]
        %v303 = vld [vmem:[%s1 + $0xc8] sm:$0xff]
        %v304 = vld [vmem:[%s1 + $0xd0] sm:$0xff]
        %v305 = vld [vmem:[%s1 + $0xd8] sm:$0xff]
        %v306 = vld [vmem:[%s1 + $0xe0] sm:$0xff]
        %v307 = vld [vmem:[%s1 + $0xe8] sm:$0xff]
        %v308 = vld [vmem:[%s1 + $0xf0] sm:$0xff]
        %v309 = vld [vmem:[%s1 + $0xf8] sm:$0xff]
        %v310 = vld [vmem:[%s2] sm:$0x3]
        %v312 = vlaneseq
        %v313 = vshrl.u32 %v312, 7
        %v314 = vsub.s32 0, %v313
        %v315 = vrot.slane %v310, %v314
        %v316 = vlaneseq
        %v317 = vshrl.u32 %v316, 7
        %v318 = vsub.s32 1, %v317
        %v319 = vrot.slane %v310, %v318
        %322 = vmatprep.subr.mxu0 %v309
        %323 = vmatpush1.msra.mxu0 %v308
        %324 = vmatprep.subr.mxu0 %v307
        %325 = vmatpush1.msra.mxu0 %v306
        %326 = vmatprep.subr.mxu0 %v305
        %327 = vmatpush1.msra.mxu0 %v304
        %328 = vmatprep.subr.mxu0 %v303
        %329 = vmatpush1.msra.mxu0 %v302
        %330 = vmatprep.subr.mxu0 %v301
        %331 = vmatpush1.msra.mxu0 %v300
        %332 = vmatprep.subr.mxu0 %v299
        %333 = vmatpush1.msra.mxu0 %v298
        %334 = vmatprep.subr.mxu0 %v297
        %335 = vmatpush1.msra.mxu0 %v296
        %336 = vmatprep.subr.mxu0 %v295
        %337 = vmatpush1.msra.mxu0 %v294
        %338 = vmatprep.subr.mxu0 %v293
        %339 = vmatpush1.msra.mxu0 %v292
        %340 = vmatprep.subr.mxu0 %v291
        %341 = vmatpush1.msra.mxu0 %v290
        %342 = vmatprep.subr.mxu0 %v289
        %343 = vmatpush1.msra.mxu0 %v288
        %344 = vmatprep.subr.mxu0 %v287
        %345 = vmatpush1.msra.mxu0 %v286
        %346 = vmatprep.subr.mxu0 %v285
        %347 = vmatpush1.msra.mxu0 %v284
        %348 = vmatprep.subr.mxu0 %v283
        %349 = vmatpush1.msra.mxu0 %v282
        %350 = vmatprep.subr.mxu0 %v281
        %351 = vmatpush1.msra.mxu0 %v280
        %352 = vmatprep.subr.mxu0 %v279
        %353 = vmatpush1.msra.mxu0 %v278
        %354 = vmatprep.subr.mxu0 0.0
        %355 = vmatpush2.msra.mxu0 0.0
        %356 = vmatprep.subr.mxu0 0.0
        %357 = vmatpush2.msra.mxu0 0.0
        %358 = vmatprep.subr.mxu0 0.0
        %359 = vmatpush2.msra.mxu0 0.0
        %360 = vmatprep.subr.mxu0 0.0
        %361 = vmatpush2.msra.mxu0 0.0
        %362 = vmatprep.subr.mxu0 0.0
        %363 = vmatpush2.msra.mxu0 0.0
        %364 = vmatprep.subr.mxu0 0.0
        %365 = vmatpush2.msra.mxu0 0.0
        %366 = vmatprep.subr.mxu0 0.0
        %367 = vmatpush2.msra.mxu0 0.0
        %368 = vmatprep.subr.mxu0 0.0
        %369 = vmatpush2.msra.mxu0 0.0
        %370 = vmatprep.subr.mxu0 0.0
        %371 = vmatpush2.msra.mxu0 0.0
        %372 = vmatprep.subr.mxu0 0.0
        %373 = vmatpush2.msra.mxu0 0.0
        %374 = vmatprep.subr.mxu0 0.0
        %375 = vmatpush2.msra.mxu0 0.0
        %376 = vmatprep.subr.mxu0 0.0
        %377 = vmatpush2.msra.mxu0 0.0
        %378 = vmatprep.subr.mxu0 0.0
        %379 = vmatpush2.msra.mxu0 0.0
        %380 = vmatprep.subr.mxu0 0.0
        %381 = vmatpush2.msra.mxu0 0.0
        %382 = vmatprep.subr.mxu0 0.0
        %383 = vmatpush2.msra.mxu0 0.0
        %384 = vmatprep.subr.mxu0 0.0
        %385 = vmatpush2.msra.mxu0 0.0
        %386 = vmatprep.mubr.f32.mxu0 0.0
        %387 = vmatmul.mubr.f32.gmra.mxu0 %v246
        %v388 = vpop.f32.mrf.mxu0
        %v389 = vadd.f32 %v315, %v388
        %v390 = vpop.f32.mrf.mxu0
        %v391 = vadd.f32 %v319, %v390
        %392 = vmatprep.mubr.f32.mxu0 0.0
        %393 = vmatmul.mubr.f32.gmra.mxu0 %v247
        %v394 = vpop.f32.mrf.mxu0
        %v395 = vadd.f32 %v315, %v394
        %v396 = vpop.f32.mrf.mxu0
        %v397 = vadd.f32 %v319, %v396
        %398 = vmatprep.mubr.f32.mxu0 0.0
        %399 = vmatmul.mubr.f32.gmra.mxu0 %v248
        %v400 = vpop.f32.mrf.mxu0
        %v401 = vadd.f32 %v315, %v400
        %v402 = vpop.f32.mrf.mxu0
        %v403 = vadd.f32 %v319, %v402
        %404 = vmatprep.mubr.f32.mxu0 0.0
        %405 = vmatmul.mubr.f32.gmra.mxu0 %v249
        %v406 = vpop.f32.mrf.mxu0
        %v407 = vadd.f32 %v315, %v406
        %v408 = vpop.f32.mrf.mxu0
        %v409 = vadd.f32 %v319, %v408
        %410 = vmatprep.mubr.f32.mxu0 0.0
        %411 = vmatmul.mubr.f32.gmra.mxu0 %v250
        %v412 = vpop.f32.mrf.mxu0
        %v413 = vadd.f32 %v315, %v412
        %v414 = vpop.f32.mrf.mxu0
        %v415 = vadd.f32 %v319, %v414
        %416 = vmatprep.mubr.f32.mxu0 0.0
        %417 = vmatmul.mubr.f32.gmra.mxu0 %v251
        %v418 = vpop.f32.mrf.mxu0
        %v419 = vadd.f32 %v315, %v418
        %v420 = vpop.f32.mrf.mxu0
        %v421 = vadd.f32 %v319, %v420
        %422 = vmatprep.mubr.f32.mxu0 0.0
        %423 = vmatmul.mubr.f32.gmra.mxu0 %v252
        %v424 = vpop.f32.mrf.mxu0
        %v425 = vadd.f32 %v315, %v424
        %v426 = vpop.f32.mrf.mxu0
        %v427 = vadd.f32 %v319, %v426
        %428 = vmatprep.mubr.f32.mxu0 0.0
        %429 = vmatmul.mubr.f32.gmra.mxu0 %v253
        %v430 = vpop.f32.mrf.mxu0
        %v431 = vadd.f32 %v315, %v430
        %v432 = vpop.f32.mrf.mxu0
        %v433 = vadd.f32 %v319, %v432
        %434 = vmatprep.mubr.f32.mxu0 0.0
        %435 = vmatmul.mubr.f32.gmra.mxu0 %v254
        %v436 = vpop.f32.mrf.mxu0
        %v437 = vadd.f32 %v315, %v436
        %v438 = vpop.f32.mrf.mxu0
        %v439 = vadd.f32 %v319, %v438
        %440 = vmatprep.mubr.f32.mxu0 0.0
        %441 = vmatmul.mubr.f32.gmra.mxu0 %v255
        %v442 = vpop.f32.mrf.mxu0
        %v443 = vadd.f32 %v315, %v442
        %v444 = vpop.f32.mrf.mxu0
        %v445 = vadd.f32 %v319, %v444
        %446 = vmatprep.mubr.f32.mxu0 0.0
        %447 = vmatmul.mubr.f32.gmra.mxu0 %v256
        %v448 = vpop.f32.mrf.mxu0
        %v449 = vadd.f32 %v315, %v448
        %v450 = vpop.f32.mrf.mxu0
        %v451 = vadd.f32 %v319, %v450
        %452 = vmatprep.mubr.f32.mxu0 0.0
        %453 = vmatmul.mubr.f32.gmra.mxu0 %v257
        %v454 = vpop.f32.mrf.mxu0
        %v455 = vadd.f32 %v315, %v454
        %v456 = vpop.f32.mrf.mxu0
        %v457 = vadd.f32 %v319, %v456
        %458 = vmatprep.mubr.f32.mxu0 0.0
        %459 = vmatmul.mubr.f32.gmra.mxu0 %v258
        %v460 = vpop.f32.mrf.mxu0
        %v461 = vadd.f32 %v315, %v460
        %v462 = vpop.f32.mrf.mxu0
        %v463 = vadd.f32 %v319, %v462
        %464 = vmatprep.mubr.f32.mxu0 0.0
        %465 = vmatmul.mubr.f32.gmra.mxu0 %v259
        %v466 = vpop.f32.mrf.mxu0
        %v467 = vadd.f32 %v315, %v466
        %v468 = vpop.f32.mrf.mxu0
        %v469 = vadd.f32 %v319, %v468
        %470 = vmatprep.mubr.f32.mxu0 0.0
        %471 = vmatmul.mubr.f32.gmra.mxu0 %v260
        %v472 = vpop.f32.mrf.mxu0
        %v473 = vadd.f32 %v315, %v472
        %v474 = vpop.f32.mrf.mxu0
        %v475 = vadd.f32 %v319, %v474
        %476 = vmatprep.mubr.f32.mxu0 0.0
        %477 = vmatmul.mubr.f32.gmra.mxu0 %v261
        %v478 = vpop.f32.mrf.mxu0
        %v479 = vadd.f32 %v315, %v478
        %v480 = vpop.f32.mrf.mxu0
        %v481 = vadd.f32 %v319, %v480
        %482 = vmatprep.mubr.f32.mxu0 0.0
        %483 = vmatmul.mubr.f32.gmra.mxu0 %v262
        %v484 = vpop.f32.mrf.mxu0
        %v485 = vadd.f32 %v315, %v484
        %v486 = vpop.f32.mrf.mxu0
        %v487 = vadd.f32 %v319, %v486
        %488 = vmatprep.mubr.f32.mxu0 0.0
        %489 = vmatmul.mubr.f32.gmra.mxu0 %v263
        %v490 = vpop.f32.mrf.mxu0
        %v491 = vadd.f32 %v315, %v490
        %v492 = vpop.f32.mrf.mxu0
        %v493 = vadd.f32 %v319, %v492
        %494 = vmatprep.mubr.f32.mxu0 0.0
        %495 = vmatmul.mubr.f32.gmra.mxu0 %v264
        %v496 = vpop.f32.mrf.mxu0
        %v497 = vadd.f32 %v315, %v496
        %v498 = vpop.f32.mrf.mxu0
        %v499 = vadd.f32 %v319, %v498
        %500 = vmatprep.mubr.f32.mxu0 0.0
        %501 = vmatmul.mubr.f32.gmra.mxu0 %v265
        %v502 = vpop.f32.mrf.mxu0
        %v503 = vadd.f32 %v315, %v502
        %v504 = vpop.f32.mrf.mxu0
        %v505 = vadd.f32 %v319, %v504
        %506 = vmatprep.mubr.f32.mxu0 0.0
        %507 = vmatmul.mubr.f32.gmra.mxu0 %v266
        %v508 = vpop.f32.mrf.mxu0
        %v509 = vadd.f32 %v315, %v508
        %v510 = vpop.f32.mrf.mxu0
        %v511 = vadd.f32 %v319, %v510
        %512 = vmatprep.mubr.f32.mxu0 0.0
        %513 = vmatmul.mubr.f32.gmra.mxu0 %v267
        %v514 = vpop.f32.mrf.mxu0
        %v515 = vadd.f32 %v315, %v514
        %v516 = vpop.f32.mrf.mxu0
        %v517 = vadd.f32 %v319, %v516
        %518 = vmatprep.mubr.f32.mxu0 0.0
        %519 = vmatmul.mubr.f32.gmra.mxu0 %v268
        %v520 = vpop.f32.mrf.mxu0
        %v521 = vadd.f32 %v315, %v520
        %v522 = vpop.f32.mrf.mxu0
        %v523 = vadd.f32 %v319, %v522
        %524 = vmatprep.mubr.f32.mxu0 0.0
        %525 = vmatmul.mubr.f32.gmra.mxu0 %v269
        %v526 = vpop.f32.mrf.mxu0
        %v527 = vadd.f32 %v315, %v526
        %v528 = vpop.f32.mrf.mxu0
        %v529 = vadd.f32 %v319, %v528
        %530 = vmatprep.mubr.f32.mxu0 0.0
        %531 = vmatmul.mubr.f32.gmra.mxu0 %v270
        %v532 = vpop.f32.mrf.mxu0
        %v533 = vadd.f32 %v315, %v532
        %v534 = vpop.f32.mrf.mxu0
        %v535 = vadd.f32 %v319, %v534
        %536 = vmatprep.mubr.f32.mxu0 0.0
        %537 = vmatmul.mubr.f32.gmra.mxu0 %v271
        %v538 = vpop.f32.mrf.mxu0
        %v539 = vadd.f32 %v315, %v538
        %v540 = vpop.f32.mrf.mxu0
        %v541 = vadd.f32 %v319, %v540
        %542 = vmatprep.mubr.f32.mxu0 0.0
        %543 = vmatmul.mubr.f32.gmra.mxu0 %v272
        %v544 = vpop.f32.mrf.mxu0
        %v545 = vadd.f32 %v315, %v544
        %v546 = vpop.f32.mrf.mxu0
        %v547 = vadd.f32 %v319, %v546
        %548 = vmatprep.mubr.f32.mxu0 0.0
        %549 = vmatmul.mubr.f32.gmra.mxu0 %v273
        %v550 = vpop.f32.mrf.mxu0
        %v551 = vadd.f32 %v315, %v550
        %v552 = vpop.f32.mrf.mxu0
        %v553 = vadd.f32 %v319, %v552
        %554 = vmatprep.mubr.f32.mxu0 0.0
        %555 = vmatmul.mubr.f32.gmra.mxu0 %v274
        %v556 = vpop.f32.mrf.mxu0
        %v557 = vadd.f32 %v315, %v556
        %v558 = vpop.f32.mrf.mxu0
        %v559 = vadd.f32 %v319, %v558
        %560 = vmatprep.mubr.f32.mxu0 0.0
        %561 = vmatmul.mubr.f32.gmra.mxu0 %v275
        %v562 = vpop.f32.mrf.mxu0
        %v563 = vadd.f32 %v315, %v562
        %v564 = vpop.f32.mrf.mxu0
        %v565 = vadd.f32 %v319, %v564
        %566 = vmatprep.mubr.f32.mxu0 0.0
        %567 = vmatmul.mubr.f32.gmra.mxu0 %v276
        %v568 = vpop.f32.mrf.mxu0
        %v569 = vadd.f32 %v315, %v568
        %v570 = vpop.f32.mrf.mxu0
        %v571 = vadd.f32 %v319, %v570
        %572 = vmatprep.mubr.f32.mxu0 0.0
        %573 = vmatmul.mubr.f32.gmra.mxu0 %v277
        %v574 = vpop.f32.mrf.mxu0
        %v575 = vadd.f32 %v315, %v574
        %v576 = vpop.f32.mrf.mxu0
        %v577 = vadd.f32 %v319, %v576
        %578 = vdwg.mxu0
        %v579 = vmul.f32 %v389, 0.5
        %v580 = vmul.f32 %v391, 0.5
        %v581 = vmul.f32 %v395, 0.5
        %v582 = vmul.f32 %v397, 0.5
        %v583 = vmul.f32 %v401, 0.5
        %v584 = vmul.f32 %v403, 0.5
        %v585 = vmul.f32 %v407, 0.5
        %v586 = vmul.f32 %v409, 0.5
        %v587 = vmul.f32 %v413, 0.5
        %v588 = vmul.f32 %v415, 0.5
        %v589 = vmul.f32 %v419, 0.5
        %v590 = vmul.f32 %v421, 0.5
        %v591 = vmul.f32 %v425, 0.5
        %v592 = vmul.f32 %v427, 0.5
        %v593 = vmul.f32 %v431, 0.5
        %v594 = vmul.f32 %v433, 0.5
        %v595 = vmul.f32 %v437, 0.5
        %v596 = vmul.f32 %v439, 0.5
        %v597 = vmul.f32 %v443, 0.5
        %v598 = vmul.f32 %v445, 0.5
        %v599 = vmul.f32 %v449, 0.5
        %v600 = vmul.f32 %v451, 0.5
        %v601 = vmul.f32 %v455, 0.5
        %v602 = vmul.f32 %v457, 0.5
        %v603 = vmul.f32 %v461, 0.5
        %v604 = vmul.f32 %v463, 0.5
        %v605 = vmul.f32 %v467, 0.5
        %v606 = vmul.f32 %v469, 0.5
        %v607 = vmul.f32 %v473, 0.5
        %v608 = vmul.f32 %v475, 0.5
        %v609 = vmul.f32 %v479, 0.5
        %v610 = vmul.f32 %v481, 0.5
        %v611 = vmul.f32 %v485, 0.5
        %v612 = vmul.f32 %v487, 0.5
        %v613 = vmul.f32 %v491, 0.5
        %v614 = vmul.f32 %v493, 0.5
        %v615 = vmul.f32 %v497, 0.5
        %v616 = vmul.f32 %v499, 0.5
        %v617 = vmul.f32 %v503, 0.5
        %v618 = vmul.f32 %v505, 0.5
        %v619 = vmul.f32 %v509, 0.5
        %v620 = vmul.f32 %v511, 0.5
        %v621 = vmul.f32 %v515, 0.5
        %v622 = vmul.f32 %v517, 0.5
        %v623 = vmul.f32 %v521, 0.5
        %v624 = vmul.f32 %v523, 0.5
        %v625 = vmul.f32 %v527, 0.5
        %v626 = vmul.f32 %v529, 0.5
        %v627 = vmul.f32 %v533, 0.5
        %v628 = vmul.f32 %v535, 0.5
        %v629 = vmul.f32 %v539, 0.5
        %v630 = vmul.f32 %v541, 0.5
        %v631 = vmul.f32 %v545, 0.5
        %v632 = vmul.f32 %v547, 0.5
        %v633 = vmul.f32 %v551, 0.5
        %v634 = vmul.f32 %v553, 0.5
        %v635 = vmul.f32 %v557, 0.5
        %v636 = vmul.f32 %v559, 0.5
        %v637 = vmul.f32 %v563, 0.5
        %v638 = vmul.f32 %v565, 0.5
        %v639 = vmul.f32 %v569, 0.5
        %v640 = vmul.f32 %v571, 0.5
        %v641 = vmul.f32 %v575, 0.5
        %v642 = vmul.f32 %v577, 0.5
        %v643 = vmul.f32 %v389, 0.70710677
        %v644 = vmul.f32 %v391, 0.70710677
        %v645 = vmul.f32 %v395, 0.70710677
        %v646 = vmul.f32 %v397, 0.70710677
        %v647 = vmul.f32 %v401, 0.70710677
        %v648 = vmul.f32 %v403, 0.70710677
        %v649 = vmul.f32 %v407, 0.70710677
        %v650 = vmul.f32 %v409, 0.70710677
        %v651 = vmul.f32 %v413, 0.70710677
        %v652 = vmul.f32 %v415, 0.70710677
        %v653 = vmul.f32 %v419, 0.70710677
        %v654 = vmul.f32 %v421, 0.70710677
        %v655 = vmul.f32 %v425, 0.70710677
        %v656 = vmul.f32 %v427, 0.70710677
        %v657 = vmul.f32 %v431, 0.70710677
        %v658 = vmul.f32 %v433, 0.70710677
        %v659 = vmul.f32 %v437, 0.70710677
        %v660 = vmul.f32 %v439, 0.70710677
        %v661 = vmul.f32 %v443, 0.70710677
        %v662 = vmul.f32 %v445, 0.70710677
        %v663 = vmul.f32 %v449, 0.70710677
        %v664 = vmul.f32 %v451, 0.70710677
        %v665 = vmul.f32 %v455, 0.70710677
        %v666 = vmul.f32 %v457, 0.70710677
        %v667 = vmul.f32 %v461, 0.70710677
        %v668 = vmul.f32 %v463, 0.70710677
        %v669 = vmul.f32 %v467, 0.70710677
        %v670 = vmul.f32 %v469, 0.70710677
        %v671 = vmul.f32 %v473, 0.70710677
        %v672 = vmul.f32 %v475, 0.70710677
        %v673 = vmul.f32 %v479, 0.70710677
        %v674 = vmul.f32 %v481, 0.70710677
        %v675 = vmul.f32 %v485, 0.70710677
        %v676 = vmul.f32 %v487, 0.70710677
        %v677 = vmul.f32 %v491, 0.70710677
        %v678 = vmul.f32 %v493, 0.70710677
        %v679 = vmul.f32 %v497, 0.70710677
        %v680 = vmul.f32 %v499, 0.70710677
        %v681 = vmul.f32 %v503, 0.70710677
        %v682 = vmul.f32 %v505, 0.70710677
        %v683 = vmul.f32 %v509, 0.70710677
        %v684 = vmul.f32 %v511, 0.70710677
        %v685 = vmul.f32 %v515, 0.70710677
        %v686 = vmul.f32 %v517, 0.70710677
        %v687 = vmul.f32 %v521, 0.70710677
        %v688 = vmul.f32 %v523, 0.70710677
        %v689 = vmul.f32 %v527, 0.70710677
        %v690 = vmul.f32 %v529, 0.70710677
        %v691 = vmul.f32 %v533, 0.70710677
        %v692 = vmul.f32 %v535, 0.70710677
        %v693 = vmul.f32 %v539, 0.70710677
        %v694 = vmul.f32 %v541, 0.70710677
        %v695 = vmul.f32 %v545, 0.70710677
        %v696 = vmul.f32 %v547, 0.70710677
        %v697 = vmul.f32 %v551, 0.70710677
        %v698 = vmul.f32 %v553, 0.70710677
        %v699 = vmul.f32 %v557, 0.70710677
        %v700 = vmul.f32 %v559, 0.70710677
        %v701 = vmul.f32 %v563, 0.70710677
        %v702 = vmul.f32 %v565, 0.70710677
        %v703 = vmul.f32 %v569, 0.70710677
        %v704 = vmul.f32 %v571, 0.70710677
        %v705 = vmul.f32 %v575, 0.70710677
        %v706 = vmul.f32 %v577, 0.70710677
        %v707 = verf.f32.pop %v643
        %v708 = verf.f32.pop %v644
        %v709 = verf.f32.pop %v645
        %v710 = verf.f32.pop %v646
        %v711 = verf.f32.pop %v647
        %v712 = verf.f32.pop %v648
        %v713 = verf.f32.pop %v649
        %v714 = verf.f32.pop %v650
        %v715 = verf.f32.pop %v651
        %v716 = verf.f32.pop %v652
        %v717 = verf.f32.pop %v653
        %v718 = verf.f32.pop %v654
        %v719 = verf.f32.pop %v655
        %v720 = verf.f32.pop %v656
        %v721 = verf.f32.pop %v657
        %v722 = verf.f32.pop %v658
        %v723 = verf.f32.pop %v659
        %v724 = verf.f32.pop %v660
        %v725 = verf.f32.pop %v661
        %v726 = verf.f32.pop %v662
        %v727 = verf.f32.pop %v663
        %v728 = verf.f32.pop %v664
        %v729 = verf.f32.pop %v665
        %v730 = verf.f32.pop %v666
        %v731 = verf.f32.pop %v667
        %v732 = verf.f32.pop %v668
        %v733 = verf.f32.pop %v669
        %v734 = verf.f32.pop %v670
        %v735 = verf.f32.pop %v671
        %v736 = verf.f32.pop %v672
        %v737 = verf.f32.pop %v673
        %v738 = verf.f32.pop %v674
        %v739 = verf.f32.pop %v675
        %v740 = verf.f32.pop %v676
        %v741 = verf.f32.pop %v677
        %v742 = verf.f32.pop %v678
        %v743 = verf.f32.pop %v679
        %v744 = verf.f32.pop %v680
        %v745 = verf.f32.pop %v681
        %v746 = verf.f32.pop %v682
        %v747 = verf.f32.pop %v683
        %v748 = verf.f32.pop %v684
        %v749 = verf.f32.pop %v685
        %v750 = verf.f32.pop %v686
        %v751 = verf.f32.pop %v687
        %v752 = verf.f32.pop %v688
        %v753 = verf.f32.pop %v689
        %v754 = verf.f32.pop %v690
        %v755 = verf.f32.pop %v691
        %v756 = verf.f32.pop %v692
        %v757 = verf.f32.pop %v693
        %v758 = verf.f32.pop %v694
        %v759 = verf.f32.pop %v695
        %v760 = verf.f32.pop %v696
        %v761 = verf.f32.pop %v697
        %v762 = verf.f32.pop %v698
        %v763 = verf.f32.pop %v699
        %v764 = verf.f32.pop %v700
        %v765 = verf.f32.pop %v701
        %v766 = verf.f32.pop %v702
        %v767 = verf.f32.pop %v703
        %v768 = verf.f32.pop %v704
        %v769 = verf.f32.pop %v705
        %v770 = verf.f32.pop %v706
        %v771 = vadd.f32 %v707, 1.0
        %v772 = vadd.f32 %v708, 1.0
        %v773 = vadd.f32 %v709, 1.0
        %v774 = vadd.f32 %v710, 1.0
        %v775 = vadd.f32 %v711, 1.0
        %v776 = vadd.f32 %v712, 1.0
        %v777 = vadd.f32 %v713, 1.0
        %v778 = vadd.f32 %v714, 1.0
        %v779 = vadd.f32 %v715, 1.0
        %v780 = vadd.f32 %v716, 1.0
        %v781 = vadd.f32 %v717, 1.0
        %v782 = vadd.f32 %v718, 1.0
        %v783 = vadd.f32 %v719, 1.0
        %v784 = vadd.f32 %v720, 1.0
        %v785 = vadd.f32 %v721, 1.0
        %v786 = vadd.f32 %v722, 1.0
        %v787 = vadd.f32 %v723, 1.0
        %v788 = vadd.f32 %v724, 1.0
        %v789 = vadd.f32 %v725, 1.0
        %v790 = vadd.f32 %v726, 1.0
        %v791 = vadd.f32 %v727, 1.0
        %v792 = vadd.f32 %v728, 1.0
        %v793 = vadd.f32 %v729, 1.0
        %v794 = vadd.f32 %v730, 1.0
        %v795 = vadd.f32 %v731, 1.0
        %v796 = vadd.f32 %v732, 1.0
        %v797 = vadd.f32 %v733, 1.0
        %v798 = vadd.f32 %v734, 1.0
        %v799 = vadd.f32 %v735, 1.0
        %v800 = vadd.f32 %v736, 1.0
        %v801 = vadd.f32 %v737, 1.0
        %v802 = vadd.f32 %v738, 1.0
        %v803 = vadd.f32 %v739, 1.0
        %v804 = vadd.f32 %v740, 1.0
        %v805 = vadd.f32 %v741, 1.0
        %v806 = vadd.f32 %v742, 1.0
        %v807 = vadd.f32 %v743, 1.0
        %v808 = vadd.f32 %v744, 1.0
        %v809 = vadd.f32 %v745, 1.0
        %v810 = vadd.f32 %v746, 1.0
        %v811 = vadd.f32 %v747, 1.0
        %v812 = vadd.f32 %v748, 1.0
        %v813 = vadd.f32 %v749, 1.0
        %v814 = vadd.f32 %v750, 1.0
        %v815 = vadd.f32 %v751, 1.0
        %v816 = vadd.f32 %v752, 1.0
        %v817 = vadd.f32 %v753, 1.0
        %v818 = vadd.f32 %v754, 1.0
        %v819 = vadd.f32 %v755, 1.0
        %v820 = vadd.f32 %v756, 1.0
        %v821 = vadd.f32 %v757, 1.0
        %v822 = vadd.f32 %v758, 1.0
        %v823 = vadd.f32 %v759, 1.0
        %v824 = vadd.f32 %v760, 1.0
        %v825 = vadd.f32 %v761, 1.0
        %v826 = vadd.f32 %v762, 1.0
        %v827 = vadd.f32 %v763, 1.0
        %v828 = vadd.f32 %v764, 1.0
        %v829 = vadd.f32 %v765, 1.0
        %v830 = vadd.f32 %v766, 1.0
        %v831 = vadd.f32 %v767, 1.0
        %v832 = vadd.f32 %v768, 1.0
        %v833 = vadd.f32 %v769, 1.0
        %v834 = vadd.f32 %v770, 1.0
        %v835 = vmul.f32 %v579, %v771
        %v836 = vmul.f32 %v580, %v772
        %v837 = vmul.f32 %v581, %v773
        %v838 = vmul.f32 %v582, %v774
        %v839 = vmul.f32 %v583, %v775
        %v840 = vmul.f32 %v584, %v776
        %v841 = vmul.f32 %v585, %v777
        %v842 = vmul.f32 %v586, %v778
        %v843 = vmul.f32 %v587, %v779
        %v844 = vmul.f32 %v588, %v780
        %v845 = vmul.f32 %v589, %v781
        %v846 = vmul.f32 %v590, %v782
        %v847 = vmul.f32 %v591, %v783
        %v848 = vmul.f32 %v592, %v784
        %v849 = vmul.f32 %v593, %v785
        %v850 = vmul.f32 %v594, %v786
        %v851 = vmul.f32 %v595, %v787
        %v852 = vmul.f32 %v596, %v788
        %v853 = vmul.f32 %v597, %v789
        %v854 = vmul.f32 %v598, %v790
        %v855 = vmul.f32 %v599, %v791
        %v856 = vmul.f32 %v600, %v792
        %v857 = vmul.f32 %v601, %v793
        %v858 = vmul.f32 %v602, %v794
        %v859 = vmul.f32 %v603, %v795
        %v860 = vmul.f32 %v604, %v796
        %v861 = vmul.f32 %v605, %v797
        %v862 = vmul.f32 %v606, %v798
        %v863 = vmul.f32 %v607, %v799
        %v864 = vmul.f32 %v608, %v800
        %v865 = vmul.f32 %v609, %v801
        %v866 = vmul.f32 %v610, %v802
        %v867 = vmul.f32 %v611, %v803
        %v868 = vmul.f32 %v612, %v804
        %v869 = vmul.f32 %v613, %v805
        %v870 = vmul.f32 %v614, %v806
        %v871 = vmul.f32 %v615, %v807
        %v872 = vmul.f32 %v616, %v808
        %v873 = vmul.f32 %v617, %v809
        %v874 = vmul.f32 %v618, %v810
        %v875 = vmul.f32 %v619, %v811
        %v876 = vmul.f32 %v620, %v812
        %v877 = vmul.f32 %v621, %v813
        %v878 = vmul.f32 %v622, %v814
        %v879 = vmul.f32 %v623, %v815
        %v880 = vmul.f32 %v624, %v816
        %v881 = vmul.f32 %v625, %v817
        %v882 = vmul.f32 %v626, %v818
        %v883 = vmul.f32 %v627, %v819
        %v884 = vmul.f32 %v628, %v820
        %v885 = vmul.f32 %v629, %v821
        %v886 = vmul.f32 %v630, %v822
        %v887 = vmul.f32 %v631, %v823
        %v888 = vmul.f32 %v632, %v824
        %v889 = vmul.f32 %v633, %v825
        %v890 = vmul.f32 %v634, %v826
        %v891 = vmul.f32 %v635, %v827
        %v892 = vmul.f32 %v636, %v828
        %v893 = vmul.f32 %v637, %v829
        %v894 = vmul.f32 %v638, %v830
        %v895 = vmul.f32 %v639, %v831
        %v896 = vmul.f32 %v640, %v832
        %v897 = vmul.f32 %v641, %v833
        %v898 = vmul.f32 %v642, %v834
        %v899 = vld [vmem:[%s3] sm:$0xff]
        %v900 = vld [vmem:[%s3 + $0x8] sm:$0xff]
        %v901 = vld [vmem:[%s3 + $0x10] sm:$0xff]
        %v902 = vld [vmem:[%s3 + $0x18] sm:$0xff]
        %v903 = vld [vmem:[%s3 + $0x20] sm:$0xff]
        %v904 = vld [vmem:[%s3 + $0x28] sm:$0xff]
        %v905 = vld [vmem:[%s3 + $0x30] sm:$0xff]
        %v906 = vld [vmem:[%s3 + $0x38] sm:$0xff]
        %v907 = vld [vmem:[%s3 + $0x40] sm:$0xff]
        %v908 = vld [vmem:[%s3 + $0x48] sm:$0xff]
        %v909 = vld [vmem:[%s3 + $0x50] sm:$0xff]
        %v910 = vld [vmem:[%s3 + $0x58] sm:$0xff]
        %v911 = vld [vmem:[%s3 + $0x60] sm:$0xff]
        %v912 = vld [vmem:[%s3 + $0x68] sm:$0xff]
        %v913 = vld [vmem:[%s3 + $0x70] sm:$0xff]
        %v914 = vld [vmem:[%s3 + $0x78] sm:$0xff]
        %v915 = vld [vmem:[%s3 + $0x80] sm:$0xff]
        %v916 = vld [vmem:[%s3 + $0x88] sm:$0xff]
        %v917 = vld [vmem:[%s3 + $0x90] sm:$0xff]
        %v918 = vld [vmem:[%s3 + $0x98] sm:$0xff]
        %v919 = vld [vmem:[%s3 + $0xa0] sm:$0xff]
        %v920 = vld [vmem:[%s3 + $0xa8] sm:$0xff]
        %v921 = vld [vmem:[%s3 + $0xb0] sm:$0xff]
        %v922 = vld [vmem:[%s3 + $0xb8] sm:$0xff]
        %v923 = vld [vmem:[%s3 + $0xc0] sm:$0xff]
        %v924 = vld [vmem:[%s3 + $0xc8] sm:$0xff]
        %v925 = vld [vmem:[%s3 + $0xd0] sm:$0xff]
        %v926 = vld [vmem:[%s3 + $0xd8] sm:$0xff]
        %v927 = vld [vmem:[%s3 + $0xe0] sm:$0xff]
        %v928 = vld [vmem:[%s3 + $0xe8] sm:$0xff]
        %v929 = vld [vmem:[%s3 + $0xf0] sm:$0xff]
        %v930 = vld [vmem:[%s3 + $0xf8] sm:$0xff]
        %v931 = vld [vmem:[%s4] sm:$0x1]
        %v933 = vlaneseq
        %v934 = vshrl.u32 %v933, 7
        %v935 = vsub.s32 0, %v934
        %v936 = vrot.slane %v931, %v935
        %938 = vmatprep.subr.mxu0 0.0
        %939 = vmatpush1.msra.mxu0 %v914
        %940 = vmatprep.subr.mxu0 0.0
        %941 = vmatpush1.msra.mxu0 %v913
        %942 = vmatprep.subr.mxu0 0.0
        %943 = vmatpush1.msra.mxu0 %v912
        %944 = vmatprep.subr.mxu0 0.0
        %945 = vmatpush1.msra.mxu0 %v911
        %946 = vmatprep.subr.mxu0 0.0
        %947 = vmatpush1.msra.mxu0 %v910
        %948 = vmatprep.subr.mxu0 0.0
        %949 = vmatpush1.msra.mxu0 %v909
        %950 = vmatprep.subr.mxu0 0.0
        %951 = vmatpush1.msra.mxu0 %v908
        %952 = vmatprep.subr.mxu0 0.0
        %953 = vmatpush1.msra.mxu0 %v907
        %954 = vmatprep.subr.mxu0 0.0
        %955 = vmatpush1.msra.mxu0 %v906
        %956 = vmatprep.subr.mxu0 0.0
        %957 = vmatpush1.msra.mxu0 %v905
        %958 = vmatprep.subr.mxu0 0.0
        %959 = vmatpush1.msra.mxu0 %v904
        %960 = vmatprep.subr.mxu0 0.0
        %961 = vmatpush1.msra.mxu0 %v903
        %962 = vmatprep.subr.mxu0 0.0
        %963 = vmatpush1.msra.mxu0 %v902
        %964 = vmatprep.subr.mxu0 0.0
        %965 = vmatpush1.msra.mxu0 %v901
        %966 = vmatprep.subr.mxu0 0.0
        %967 = vmatpush1.msra.mxu0 %v900
        %968 = vmatprep.subr.mxu0 0.0
        %969 = vmatpush1.msra.mxu0 %v899
        %970 = vmatprep.subr.mxu0 0.0
        %971 = vmatpush2.msra.mxu0 %v930
        %972 = vmatprep.subr.mxu0 0.0
        %973 = vmatpush2.msra.mxu0 %v929
        %974 = vmatprep.subr.mxu0 0.0
        %975 = vmatpush2.msra.mxu0 %v928
        %976 = vmatprep.subr.mxu0 0.0
        %977 = vmatpush2.msra.mxu0 %v927
        %978 = vmatprep.subr.mxu0 0.0
        %979 = vmatpush2.msra.mxu0 %v926
        %980 = vmatprep.subr.mxu0 0.0
        %981 = vmatpush2.msra.mxu0 %v925
        %982 = vmatprep.subr.mxu0 0.0
        %983 = vmatpush2.msra.mxu0 %v924
        %984 = vmatprep.subr.mxu0 0.0
        %985 = vmatpush2.msra.mxu0 %v923
        %986 = vmatprep.subr.mxu0 0.0
        %987 = vmatpush2.msra.mxu0 %v922
        %988 = vmatprep.subr.mxu0 0.0
        %989 = vmatpush2.msra.mxu0 %v921
        %990 = vmatprep.subr.mxu0 0.0
        %991 = vmatpush2.msra.mxu0 %v920
        %992 = vmatprep.subr.mxu0 0.0
        %993 = vmatpush2.msra.mxu0 %v919
        %994 = vmatprep.subr.mxu0 0.0
        %995 = vmatpush2.msra.mxu0 %v918
        %996 = vmatprep.subr.mxu0 0.0
        %997 = vmatpush2.msra.mxu0 %v917
        %998 = vmatprep.subr.mxu0 0.0
        %999 = vmatpush2.msra.mxu0 %v916
        %1000 = vmatprep.subr.mxu0 0.0
        %1001 = vmatpush2.msra.mxu0 %v915
        %1002 = vmatprep.mubr.f32.mxu0 %v836
        %1003 = vmatmul.mubr.f32.gmra.mxu0 %v835
        %v1004 = vpop.f32.mrf.mxu0
        %v1005 = vadd.f32 %v936, %v1004
        %v1006 = vpop.f32.mrf.mxu0
        %1007 = vmatprep.mubr.f32.mxu0 %v838
        %1008 = vmatmul.mubr.f32.gmra.mxu0 %v837
        %v1009 = vpop.f32.mrf.mxu0
        %v1010 = vadd.f32 %v936, %v1009
        %v1011 = vpop.f32.mrf.mxu0
        %1012 = vmatprep.mubr.f32.mxu0 %v840
        %1013 = vmatmul.mubr.f32.gmra.mxu0 %v839
        %v1014 = vpop.f32.mrf.mxu0
        %v1015 = vadd.f32 %v936, %v1014
        %v1016 = vpop.f32.mrf.mxu0
        %1017 = vmatprep.mubr.f32.mxu0 %v842
        %1018 = vmatmul.mubr.f32.gmra.mxu0 %v841
        %v1019 = vpop.f32.mrf.mxu0
        %v1020 = vadd.f32 %v936, %v1019
        %v1021 = vpop.f32.mrf.mxu0
        %1022 = vmatprep.mubr.f32.mxu0 %v844
        %1023 = vmatmul.mubr.f32.gmra.mxu0 %v843
        %v1024 = vpop.f32.mrf.mxu0
        %v1025 = vadd.f32 %v936, %v1024
        %v1026 = vpop.f32.mrf.mxu0
        %1027 = vmatprep.mubr.f32.mxu0 %v846
        %1028 = vmatmul.mubr.f32.gmra.mxu0 %v845
        %v1029 = vpop.f32.mrf.mxu0
        %v1030 = vadd.f32 %v936, %v1029
        %v1031 = vpop.f32.mrf.mxu0
        %1032 = vmatprep.mubr.f32.mxu0 %v848
        %1033 = vmatmul.mubr.f32.gmra.mxu0 %v847
        %v1034 = vpop.f32.mrf.mxu0
        %v1035 = vadd.f32 %v936, %v1034
        %v1036 = vpop.f32.mrf.mxu0
        %1037 = vmatprep.mubr.f32.mxu0 %v850
        %1038 = vmatmul.mubr.f32.gmra.mxu0 %v849
        %v1039 = vpop.f32.mrf.mxu0
        %v1040 = vadd.f32 %v936, %v1039
        %v1041 = vpop.f32.mrf.mxu0
        %1042 = vmatprep.mubr.f32.mxu0 %v852
        %1043 = vmatmul.mubr.f32.gmra.mxu0 %v851
        %v1044 = vpop.f32.mrf.mxu0
        %v1045 = vadd.f32 %v936, %v1044
        %v1046 = vpop.f32.mrf.mxu0
        %1047 = vmatprep.mubr.f32.mxu0 %v854
        %1048 = vmatmul.mubr.f32.gmra.mxu0 %v853
        %v1049 = vpop.f32.mrf.mxu0
        %v1050 = vadd.f32 %v936, %v1049
        %v1051 = vpop.f32.mrf.mxu0
        %1052 = vmatprep.mubr.f32.mxu0 %v856
        %1053 = vmatmul.mubr.f32.gmra.mxu0 %v855
        %v1054 = vpop.f32.mrf.mxu0
        %v1055 = vadd.f32 %v936, %v1054
        %v1056 = vpop.f32.mrf.mxu0
        %1057 = vmatprep.mubr.f32.mxu0 %v858
        %1058 = vmatmul.mubr.f32.gmra.mxu0 %v857
        %v1059 = vpop.f32.mrf.mxu0
        %v1060 = vadd.f32 %v936, %v1059
        %v1061 = vpop.f32.mrf.mxu0
        %1062 = vmatprep.mubr.f32.mxu0 %v860
        %1063 = vmatmul.mubr.f32.gmra.mxu0 %v859
        %v1064 = vpop.f32.mrf.mxu0
        %v1065 = vadd.f32 %v936, %v1064
        %v1066 = vpop.f32.mrf.mxu0
        %1067 = vmatprep.mubr.f32.mxu0 %v862
        %1068 = vmatmul.mubr.f32.gmra.mxu0 %v861
        %v1069 = vpop.f32.mrf.mxu0
        %v1070 = vadd.f32 %v936, %v1069
        %v1071 = vpop.f32.mrf.mxu0
        %1072 = vmatprep.mubr.f32.mxu0 %v864
        %1073 = vmatmul.mubr.f32.gmra.mxu0 %v863
        %v1074 = vpop.f32.mrf.mxu0
        %v1075 = vadd.f32 %v936, %v1074
        %v1076 = vpop.f32.mrf.mxu0
        %1077 = vmatprep.mubr.f32.mxu0 %v866
        %1078 = vmatmul.mubr.f32.gmra.mxu0 %v865
        %v1079 = vpop.f32.mrf.mxu0
        %v1080 = vadd.f32 %v936, %v1079
        %v1081 = vpop.f32.mrf.mxu0
        %1082 = vmatprep.mubr.f32.mxu0 %v868
        %1083 = vmatmul.mubr.f32.gmra.mxu0 %v867
        %v1084 = vpop.f32.mrf.mxu0
        %v1085 = vadd.f32 %v936, %v1084
        %v1086 = vpop.f32.mrf.mxu0
        %1087 = vmatprep.mubr.f32.mxu0 %v870
        %1088 = vmatmul.mubr.f32.gmra.mxu0 %v869
        %v1089 = vpop.f32.mrf.mxu0
        %v1090 = vadd.f32 %v936, %v1089
        %v1091 = vpop.f32.mrf.mxu0
        %1092 = vmatprep.mubr.f32.mxu0 %v872
        %1093 = vmatmul.mubr.f32.gmra.mxu0 %v871
        %v1094 = vpop.f32.mrf.mxu0
        %v1095 = vadd.f32 %v936, %v1094
        %v1096 = vpop.f32.mrf.mxu0
        %1097 = vmatprep.mubr.f32.mxu0 %v874
        %1098 = vmatmul.mubr.f32.gmra.mxu0 %v873
        %v1099 = vpop.f32.mrf.mxu0
        %v1100 = vadd.f32 %v936, %v1099
        %v1101 = vpop.f32.mrf.mxu0
        %1102 = vmatprep.mubr.f32.mxu0 %v876
        %1103 = vmatmul.mubr.f32.gmra.mxu0 %v875
        %v1104 = vpop.f32.mrf.mxu0
        %v1105 = vadd.f32 %v936, %v1104
        %v1106 = vpop.f32.mrf.mxu0
        %1107 = vmatprep.mubr.f32.mxu0 %v878
        %1108 = vmatmul.mubr.f32.gmra.mxu0 %v877
        %v1109 = vpop.f32.mrf.mxu0
        %v1110 = vadd.f32 %v936, %v1109
        %v1111 = vpop.f32.mrf.mxu0
        %1112 = vmatprep.mubr.f32.mxu0 %v880
        %1113 = vmatmul.mubr.f32.gmra.mxu0 %v879
        %v1114 = vpop.f32.mrf.mxu0
        %v1115 = vadd.f32 %v936, %v1114
        %v1116 = vpop.f32.mrf.mxu0
        %1117 = vmatprep.mubr.f32.mxu0 %v882
        %1118 = vmatmul.mubr.f32.gmra.mxu0 %v881
        %v1119 = vpop.f32.mrf.mxu0
        %v1120 = vadd.f32 %v936, %v1119
        %v1121 = vpop.f32.mrf.mxu0
        %1122 = vmatprep.mubr.f32.mxu0 %v884
        %1123 = vmatmul.mubr.f32.gmra.mxu0 %v883
        %v1124 = vpop.f32.mrf.mxu0
        %v1125 = vadd.f32 %v936, %v1124
        %v1126 = vpop.f32.mrf.mxu0
        %1127 = vmatprep.mubr.f32.mxu0 %v886
        %1128 = vmatmul.mubr.f32.gmra.mxu0 %v885
        %v1129 = vpop.f32.mrf.mxu0
        %v1130 = vadd.f32 %v936, %v1129
        %v1131 = vpop.f32.mrf.mxu0
        %1132 = vmatprep.mubr.f32.mxu0 %v888
        %1133 = vmatmul.mubr.f32.gmra.mxu0 %v887
        %v1134 = vpop.f32.mrf.mxu0
        %v1135 = vadd.f32 %v936, %v1134
        %v1136 = vpop.f32.mrf.mxu0
        %1137 = vmatprep.mubr.f32.mxu0 %v890
        %1138 = vmatmul.mubr.f32.gmra.mxu0 %v889
        %v1139 = vpop.f32.mrf.mxu0
        %v1140 = vadd.f32 %v936, %v1139
        %v1141 = vpop.f32.mrf.mxu0
        %1142 = vmatprep.mubr.f32.mxu0 %v892
        %1143 = vmatmul.mubr.f32.gmra.mxu0 %v891
        %v1144 = vpop.f32.mrf.mxu0
        %v1145 = vadd.f32 %v936, %v1144
        %v1146 = vpop.f32.mrf.mxu0
        %1147 = vmatprep.mubr.f32.mxu0 %v894
        %1148 = vmatmul.mubr.f32.gmra.mxu0 %v893
        %v1149 = vpop.f32.mrf.mxu0
        %v1150 = vadd.f32 %v936, %v1149
        %v1151 = vpop.f32.mrf.mxu0
        %1152 = vmatprep.mubr.f32.mxu0 %v896
        %1153 = vmatmul.mubr.f32.gmra.mxu0 %v895
        %v1154 = vpop.f32.mrf.mxu0
        %v1155 = vadd.f32 %v936, %v1154
        %v1156 = vpop.f32.mrf.mxu0
        %1157 = vmatprep.mubr.f32.mxu0 %v898
        %1158 = vmatmul.mubr.f32.gmra.mxu0 %v897
        %v1159 = vpop.f32.mrf.mxu0
        %v1160 = vadd.f32 %v936, %v1159
        %v1161 = vpop.f32.mrf.mxu0
        %1162 = vdwg.mxu0
        %1163 = vst [vmem:[%s226] sm:$0xff] %v1005
        %1164 = vst [vmem:[%s226 + $0x8] sm:$0xff] %v1010
        %1165 = vst [vmem:[%s226 + $0x10] sm:$0xff] %v1015
        %1166 = vst [vmem:[%s226 + $0x18] sm:$0xff] %v1020
        %1167 = vst [vmem:[%s226 + $0x20] sm:$0xff] %v1025
        %1168 = vst [vmem:[%s226 + $0x28] sm:$0xff] %v1030
        %1169 = vst [vmem:[%s226 + $0x30] sm:$0xff] %v1035
        %1170 = vst [vmem:[%s226 + $0x38] sm:$0xff] %v1040
        %1171 = vst [vmem:[%s226 + $0x40] sm:$0xff] %v1045
        %1172 = vst [vmem:[%s226 + $0x48] sm:$0xff] %v1050
        %1173 = vst [vmem:[%s226 + $0x50] sm:$0xff] %v1055
        %1174 = vst [vmem:[%s226 + $0x58] sm:$0xff] %v1060
        %1175 = vst [vmem:[%s226 + $0x60] sm:$0xff] %v1065
        %1176 = vst [vmem:[%s226 + $0x68] sm:$0xff] %v1070
        %1177 = vst [vmem:[%s226 + $0x70] sm:$0xff] %v1075
        %1178 = vst [vmem:[%s226 + $0x78] sm:$0xff] %v1080
        %1179 = vst [vmem:[%s226 + $0x80] sm:$0xff] %v1085
        %1180 = vst [vmem:[%s226 + $0x88] sm:$0xff] %v1090
        %1181 = vst [vmem:[%s226 + $0x90] sm:$0xff] %v1095
        %1182 = vst [vmem:[%s226 + $0x98] sm:$0xff] %v1100
        %1183 = vst [vmem:[%s226 + $0xa0] sm:$0xff] %v1105
        %1184 = vst [vmem:[%s226 + $0xa8] sm:$0xff] %v1110
        %1185 = vst [vmem:[%s226 + $0xb0] sm:$0xff] %v1115
        %1186 = vst [vmem:[%s226 + $0xb8] sm:$0xff] %v1120
        %1187 = vst [vmem:[%s226 + $0xc0] sm:$0xff] %v1125
        %1188 = vst [vmem:[%s226 + $0xc8] sm:$0xff] %v1130
        %1189 = vst [vmem:[%s226 + $0xd0] sm:$0xff] %v1135
        %1190 = vst [vmem:[%s226 + $0xd8] sm:$0xff] %v1140
        %1191 = vst [vmem:[%s226 + $0xe0] sm:$0xff] %v1145
        %1192 = vst [vmem:[%s226 + $0xe8] sm:$0xff] %v1150
        %1193 = vst [vmem:[%s226 + $0xf0] sm:$0xff] %v1155
        %1194 = vst [vmem:[%s226 + $0xf8] sm:$0xff] %v1160
        %s1195 = sand.u32 %s134, 1
        %s1196 = sand.u32 %s134, 1
        %s1197 = smul.addr %s1196, 256
        %s1198 = scalar_lea.vmem [#allocation2], %s1197
        // Predicated region
        $region41: #{mlp_pallas.1} parent=39 // pred_check
          %p1199 = pneg %p144
        $region42: #{mlp_pallas.1} parent=39 // pred_check_branch
          %1201 = sbr.rel (%p1199) target = $region44
        $region43: #{mlp_pallas.1} parent=39 // pred_region
          %s1202 = smul.u32 32, %s16
          %s1203 = ssub.s32 50, %s1202
          %p1204 = scmp.lt.s32.totalorder %s1203, 32
          %s1205 = scalar_select %p1204, %s1203, 32
          %s1206 = smul.u32 128, %s1205
          %p1207 = scmp.ne.s32.totalorder 0, %s1206
          %s1208 = smul.addr %s1202, 8
          %s1209 = scalar_lea.vmem %s5, %s1208
          // Predicated region
          $region45: #{mlp_pallas.1} parent=43 // pred_check
            %p1210 = pneg %p1207
          $region46: #{mlp_pallas.1} parent=43 // pred_check_branch
            %1212 = sbr.rel (%p1210) target = $region48
          $region47: #{mlp_pallas.1} parent=43 // pred_region
            // Predicated region
            $region49: #{mlp_pallas.1} parent=47 // pred_check
              _
            $region50: #{mlp_pallas.1} parent=47 // pred_check_branch
              %1214 = sbr.rel (0) target = $region52
            $region51: #{mlp_pallas.1} parent=47 // pred_region
              // Predicated region
              $region71: #{mlp_pallas.1} parent=51 // pred_check
                _
              $region72: #{mlp_pallas.1} parent=51 // pred_check_branch
                %1326 = sbr.rel (0) target = $region74
              $region73: #{mlp_pallas.1} parent=51 // pred_region
                %s1327 = sshrl.u32 %s1205, 5
                // While loop
                $region75: #{mlp_pallas.1} parent=73 // loop_pre_header
                  _
                $region76: #{mlp_pallas.1} parent=73 // loop_header
                  %s1329 = sphi 0, %s1331
                  %p1330 = scmp.ge.s32.totalorder %s1329, %s1327
                  %s1334 = sphi 0, %s1403
                  %s1335 = sphi %s1198, %s1406
                  %s1336 = sphi %s1209, %s1407
                $region77: #{mlp_pallas.1} parent=73 // loop_header_branch
                  %1333 = sbr.rel (%p1330) target = $region81
                $region78: #{mlp_pallas.1} parent=73 // loop_body
                  %v1337 = vld [vmem:[%s1335] sm:$0xff]
                  %1338 = vst [vmem:[%s1336] sm:$0xff] %v1337
                  %v1339 = vld [vmem:[%s1335 + $0x8] sm:$0xff]
                  %1340 = vst [vmem:[%s1336 + $0x8] sm:$0xff] %v1339
                  %v1341 = vld [vmem:[%s1335 + $0x10] sm:$0xff]
                  %1342 = vst [vmem:[%s1336 + $0x10] sm:$0xff] %v1341
                  %v1343 = vld [vmem:[%s1335 + $0x18] sm:$0xff]
                  %1344 = vst [vmem:[%s1336 + $0x18] sm:$0xff] %v1343
                  %v1345 = vld [vmem:[%s1335 + $0x20] sm:$0xff]
                  %1346 = vst [vmem:[%s1336 + $0x20] sm:$0xff] %v1345
                  %v1347 = vld [vmem:[%s1335 + $0x28] sm:$0xff]
                  %1348 = vst [vmem:[%s1336 + $0x28] sm:$0xff] %v1347
                  %v1349 = vld [vmem:[%s1335 + $0x30] sm:$0xff]
                  %1350 = vst [vmem:[%s1336 + $0x30] sm:$0xff] %v1349
                  %v1351 = vld [vmem:[%s1335 + $0x38] sm:$0xff]
                  %1352 = vst [vmem:[%s1336 + $0x38] sm:$0xff] %v1351
                  %v1353 = vld [vmem:[%s1335 + $0x40] sm:$0xff]
                  %1354 = vst [vmem:[%s1336 + $0x40] sm:$0xff] %v1353
                  %v1355 = vld [vmem:[%s1335 + $0x48] sm:$0xff]
                  %1356 = vst [vmem:[%s1336 + $0x48] sm:$0xff] %v1355
                  %v1357 = vld [vmem:[%s1335 + $0x50] sm:$0xff]
                  %1358 = vst [vmem:[%s1336 + $0x50] sm:$0xff] %v1357
                  %v1359 = vld [vmem:[%s1335 + $0x58] sm:$0xff]
                  %1360 = vst [vmem:[%s1336 + $0x58] sm:$0xff] %v1359
                  %v1361 = vld [vmem:[%s1335 + $0x60] sm:$0xff]
                  %1362 = vst [vmem:[%s1336 + $0x60] sm:$0xff] %v1361
                  %v1363 = vld [vmem:[%s1335 + $0x68] sm:$0xff]
                  %1364 = vst [vmem:[%s1336 + $0x68] sm:$0xff] %v1363
                  %v1365 = vld [vmem:[%s1335 + $0x70] sm:$0xff]
                  %1366 = vst [vmem:[%s1336 + $0x70] sm:$0xff] %v1365
                  %v1367 = vld [vmem:[%s1335 + $0x78] sm:$0xff]
                  %1368 = vst [vmem:[%s1336 + $0x78] sm:$0xff] %v1367
                  %v1369 = vld [vmem:[%s1335 + $0x80] sm:$0xff]
                  %1370 = vst [vmem:[%s1336 + $0x80] sm:$0xff] %v1369
                  %v1371 = vld [vmem:[%s1335 + $0x88] sm:$0xff]
                  %1372 = vst [vmem:[%s1336 + $0x88] sm:$0xff] %v1371
                  %v1373 = vld [vmem:[%s1335 + $0x90] sm:$0xff]
                  %1374 = vst [vmem:[%s1336 + $0x90] sm:$0xff] %v1373
                  %v1375 = vld [vmem:[%s1335 + $0x98] sm:$0xff]
                  %1376 = vst [vmem:[%s1336 + $0x98] sm:$0xff] %v1375
                  %v1377 = vld [vmem:[%s1335 + $0xa0] sm:$0xff]
                  %1378 = vst [vmem:[%s1336 + $0xa0] sm:$0xff] %v1377
                  %v1379 = vld [vmem:[%s1335 + $0xa8] sm:$0xff]
                  %1380 = vst [vmem:[%s1336 + $0xa8] sm:$0xff] %v1379
                  %v1381 = vld [vmem:[%s1335 + $0xb0] sm:$0xff]
                  %1382 = vst [vmem:[%s1336 + $0xb0] sm:$0xff] %v1381
                  %v1383 = vld [vmem:[%s1335 + $0xb8] sm:$0xff]
                  %1384 = vst [vmem:[%s1336 + $0xb8] sm:$0xff] %v1383
                  %v1385 = vld [vmem:[%s1335 + $0xc0] sm:$0xff]
                  %1386 = vst [vmem:[%s1336 + $0xc0] sm:$0xff] %v1385
                  %v1387 = vld [vmem:[%s1335 + $0xc8] sm:$0xff]
                  %1388 = vst [vmem:[%s1336 + $0xc8] sm:$0xff] %v1387
                  %v1389 = vld [vmem:[%s1335 + $0xd0] sm:$0xff]
                  %1390 = vst [vmem:[%s1336 + $0xd0] sm:$0xff] %v1389
                  %v1391 = vld [vmem:[%s1335 + $0xd8] sm:$0xff]
                  %1392 = vst [vmem:[%s1336 + $0xd8] sm:$0xff] %v1391
                  %v1393 = vld [vmem:[%s1335 + $0xe0] sm:$0xff]
                  %1394 = vst [vmem:[%s1336 + $0xe0] sm:$0xff] %v1393
                  %v1395 = vld [vmem:[%s1335 + $0xe8] sm:$0xff]
                  %1396 = vst [vmem:[%s1336 + $0xe8] sm:$0xff] %v1395
                  %v1397 = vld [vmem:[%s1335 + $0xf0] sm:$0xff]
                  %1398 = vst [vmem:[%s1336 + $0xf0] sm:$0xff] %v1397
                  %v1399 = vld [vmem:[%s1335 + $0xf8] sm:$0xff]
                  %1400 = vst [vmem:[%s1336 + $0xf8] sm:$0xff] %v1399
                  %s1401 = sadd.s32 1, %s1334
                  %p1402 = scmp.ge.s32.totalorder %s1401, %s1327
                  %s1403 = scalar_select %p1402, 0, %s1401
                  %s1404 = smul.u32 %s1403, 256
                  %s1405 = smul.u32 %s1403, 256
                  %s1406 = scalar_lea.vmem %s1198, %s1404 [#allocation2]
                  %s1407 = scalar_lea.vmem %s1209, %s1405
                $region79: #{mlp_pallas.1} parent=73 // loop_footer
                  %s1331 = sadd.s32 %s1329, 1
                $region80: #{mlp_pallas.1} parent=73 // loop_footer_branch
                  %1328 = sbr.rel target = $region76
                $region81: #{mlp_pallas.1} parent=73 // loop_exit
                  _
                %s1408 = sshrl.u32 %s1205, 5
                %s1409 = sand.u32 %s1205, 31
                %s1410 = smul.u32 %s1408, 32
                %s1411 = smul.u32 8, %s1410
                %s1412 = scalar_lea.vmem %s1198, %s1411 [#allocation2]
                %s1413 = smul.u32 8, %s1410
                %s1414 = scalar_lea.vmem %s1209, %s1413
                // While loop
                $region82: #{mlp_pallas.1} parent=73 // loop_pre_header
                  _
                $region83: #{mlp_pallas.1} parent=73 // loop_header
                  %s1416 = sphi 0, %s1418
                  %p1417 = scmp.ge.s32.totalorder %s1416, %s1409
                  %s1421 = sphi 0, %s1428
                  %s1422 = sphi %s1412, %s1431
                  %s1423 = sphi %s1414, %s1432
                $region84: #{mlp_pallas.1} parent=73 // loop_header_branch
                  %1420 = sbr.rel (%p1417) target = $region88
                $region85: #{mlp_pallas.1} parent=73 // loop_body
                  %v1424 = vld [vmem:[%s1422] sm:$0xff]
                  %1425 = vst [vmem:[%s1423] sm:$0xff] %v1424
                  %s1426 = sadd.s32 1, %s1421
                  %p1427 = scmp.ge.s32.totalorder %s1426, %s1409
                  %s1428 = scalar_select %p1427, 0, %s1426
                  %s1429 = smul.u32 %s1428, 8
                  %s1430 = smul.u32 %s1428, 8
                  %s1431 = scalar_lea.vmem %s1412, %s1429 [#allocation2]
                  %s1432 = scalar_lea.vmem %s1414, %s1430
                $region86: #{mlp_pallas.1} parent=73 // loop_footer
                  %s1418 = sadd.s32 %s1416, 1
                $region87: #{mlp_pallas.1} parent=73 // loop_footer_branch
                  %1415 = sbr.rel target = $region83
                $region88: #{mlp_pallas.1} parent=73 // loop_exit
                  _
              $region74: #{mlp_pallas.1} parent=51 // pred_fallthru
                _
              // Predicated region
              $region89: #{mlp_pallas.1} parent=51 // pred_check
                _
              $region90: #{mlp_pallas.1} parent=51 // pred_check_branch
                %1434 = sbr.rel target = $region92
              $region91: #{mlp_pallas.1} parent=51 // pred_region
                _
              $region92: #{mlp_pallas.1} parent=51 // pred_fallthru
                _
            $region52: #{mlp_pallas.1} parent=47 // pred_fallthru
              _
            // Predicated region
            $region53: #{mlp_pallas.1} parent=47 // pred_check
              _
            $region54: #{mlp_pallas.1} parent=47 // pred_check_branch
              %1216 = sbr.rel target = $region56
            $region55: #{mlp_pallas.1} parent=47 // pred_region
              %s1218 = ssub.s32 256, 1
              %s1219 = sshrl.u32 %s1205, 5
              // While loop
              $region57: #{mlp_pallas.1} parent=55 // loop_pre_header
                _
              $region58: #{mlp_pallas.1} parent=55 // loop_header
                %s1221 = sphi 0, %s1223
                %p1222 = scmp.ge.s32.totalorder %s1221, %s1219
                %s1226 = sphi 0, %s1295
                %s1227 = sphi %s1198, %s1298
                %s1228 = sphi %s1209, %s1299
              $region59: #{mlp_pallas.1} parent=55 // loop_header_branch
                %1225 = sbr.rel (%p1222) target = $region63
              $region60: #{mlp_pallas.1} parent=55 // loop_body
                %v1229 = vld [vmem:[%s1227] sm:%s1218]
                %1230 = vst [vmem:[%s1228] sm:%s1218] %v1229
                %v1231 = vld [vmem:[%s1227 + $0x8] sm:%s1218]
                %1232 = vst [vmem:[%s1228 + $0x8] sm:%s1218] %v1231
                %v1233 = vld [vmem:[%s1227 + $0x10] sm:%s1218]
                %1234 = vst [vmem:[%s1228 + $0x10] sm:%s1218] %v1233
                %v1235 = vld [vmem:[%s1227 + $0x18] sm:%s1218]
                %1236 = vst [vmem:[%s1228 + $0x18] sm:%s1218] %v1235
                %v1237 = vld [vmem:[%s1227 + $0x20] sm:%s1218]
                %1238 = vst [vmem:[%s1228 + $0x20] sm:%s1218] %v1237
                %v1239 = vld [vmem:[%s1227 + $0x28] sm:%s1218]
                %1240 = vst [vmem:[%s1228 + $0x28] sm:%s1218] %v1239
                %v1241 = vld [vmem:[%s1227 + $0x30] sm:%s1218]
                %1242 = vst [vmem:[%s1228 + $0x30] sm:%s1218] %v1241
                %v1243 = vld [vmem:[%s1227 + $0x38] sm:%s1218]
                %1244 = vst [vmem:[%s1228 + $0x38] sm:%s1218] %v1243
                %v1245 = vld [vmem:[%s1227 + $0x40] sm:%s1218]
                %1246 = vst [vmem:[%s1228 + $0x40] sm:%s1218] %v1245
                %v1247 = vld [vmem:[%s1227 + $0x48] sm:%s1218]
                %1248 = vst [vmem:[%s1228 + $0x48] sm:%s1218] %v1247
                %v1249 = vld [vmem:[%s1227 + $0x50] sm:%s1218]
                %1250 = vst [vmem:[%s1228 + $0x50] sm:%s1218] %v1249
                %v1251 = vld [vmem:[%s1227 + $0x58] sm:%s1218]
                %1252 = vst [vmem:[%s1228 + $0x58] sm:%s1218] %v1251
                %v1253 = vld [vmem:[%s1227 + $0x60] sm:%s1218]
                %1254 = vst [vmem:[%s1228 + $0x60] sm:%s1218] %v1253
                %v1255 = vld [vmem:[%s1227 + $0x68] sm:%s1218]
                %1256 = vst [vmem:[%s1228 + $0x68] sm:%s1218] %v1255
                %v1257 = vld [vmem:[%s1227 + $0x70] sm:%s1218]
                %1258 = vst [vmem:[%s1228 + $0x70] sm:%s1218] %v1257
                %v1259 = vld [vmem:[%s1227 + $0x78] sm:%s1218]
                %1260 = vst [vmem:[%s1228 + $0x78] sm:%s1218] %v1259
                %v1261 = vld [vmem:[%s1227 + $0x80] sm:%s1218]
                %1262 = vst [vmem:[%s1228 + $0x80] sm:%s1218] %v1261
                %v1263 = vld [vmem:[%s1227 + $0x88] sm:%s1218]
                %1264 = vst [vmem:[%s1228 + $0x88] sm:%s1218] %v1263
                %v1265 = vld [vmem:[%s1227 + $0x90] sm:%s1218]
                %1266 = vst [vmem:[%s1228 + $0x90] sm:%s1218] %v1265
                %v1267 = vld [vmem:[%s1227 + $0x98] sm:%s1218]
                %1268 = vst [vmem:[%s1228 + $0x98] sm:%s1218] %v1267
                %v1269 = vld [vmem:[%s1227 + $0xa0] sm:%s1218]
                %1270 = vst [vmem:[%s1228 + $0xa0] sm:%s1218] %v1269
                %v1271 = vld [vmem:[%s1227 + $0xa8] sm:%s1218]
                %1272 = vst [vmem:[%s1228 + $0xa8] sm:%s1218] %v1271
                %v1273 = vld [vmem:[%s1227 + $0xb0] sm:%s1218]
                %1274 = vst [vmem:[%s1228 + $0xb0] sm:%s1218] %v1273
                %v1275 = vld [vmem:[%s1227 + $0xb8] sm:%s1218]
                %1276 = vst [vmem:[%s1228 + $0xb8] sm:%s1218] %v1275
                %v1277 = vld [vmem:[%s1227 + $0xc0] sm:%s1218]
                %1278 = vst [vmem:[%s1228 + $0xc0] sm:%s1218] %v1277
                %v1279 = vld [vmem:[%s1227 + $0xc8] sm:%s1218]
                %1280 = vst [vmem:[%s1228 + $0xc8] sm:%s1218] %v1279
                %v1281 = vld [vmem:[%s1227 + $0xd0] sm:%s1218]
                %1282 = vst [vmem:[%s1228 + $0xd0] sm:%s1218] %v1281
                %v1283 = vld [vmem:[%s1227 + $0xd8] sm:%s1218]
                %1284 = vst [vmem:[%s1228 + $0xd8] sm:%s1218] %v1283
                %v1285 = vld [vmem:[%s1227 + $0xe0] sm:%s1218]
                %1286 = vst [vmem:[%s1228 + $0xe0] sm:%s1218] %v1285
                %v1287 = vld [vmem:[%s1227 + $0xe8] sm:%s1218]
                %1288 = vst [vmem:[%s1228 + $0xe8] sm:%s1218] %v1287
                %v1289 = vld [vmem:[%s1227 + $0xf0] sm:%s1218]
                %1290 = vst [vmem:[%s1228 + $0xf0] sm:%s1218] %v1289
                %v1291 = vld [vmem:[%s1227 + $0xf8] sm:%s1218]
                %1292 = vst [vmem:[%s1228 + $0xf8] sm:%s1218] %v1291
                %s1293 = sadd.s32 1, %s1226
                %p1294 = scmp.ge.s32.totalorder %s1293, %s1219
                %s1295 = scalar_select %p1294, 0, %s1293
                %s1296 = smul.u32 %s1295, 256
                %s1297 = smul.u32 %s1295, 256
                %s1298 = scalar_lea.vmem %s1198, %s1296 [#allocation2]
                %s1299 = scalar_lea.vmem %s1209, %s1297
              $region61: #{mlp_pallas.1} parent=55 // loop_footer
                %s1223 = sadd.s32 %s1221, 1
              $region62: #{mlp_pallas.1} parent=55 // loop_footer_branch
                %1220 = sbr.rel target = $region58
              $region63: #{mlp_pallas.1} parent=55 // loop_exit
                _
              %s1300 = sshrl.u32 %s1205, 5
              %s1301 = sand.u32 %s1205, 31
              %s1302 = smul.u32 %s1300, 32
              %s1303 = smul.u32 8, %s1302
              %s1304 = scalar_lea.vmem %s1198, %s1303 [#allocation2]
              %s1305 = smul.u32 8, %s1302
              %s1306 = scalar_lea.vmem %s1209, %s1305
              // While loop
              $region64: #{mlp_pallas.1} parent=55 // loop_pre_header
                _
              $region65: #{mlp_pallas.1} parent=55 // loop_header
                %s1308 = sphi 0, %s1310
                %p1309 = scmp.ge.s32.totalorder %s1308, %s1301
                %s1313 = sphi 0, %s1320
                %s1314 = sphi %s1304, %s1323
                %s1315 = sphi %s1306, %s1324
              $region66: #{mlp_pallas.1} parent=55 // loop_header_branch
                %1312 = sbr.rel (%p1309) target = $region70
              $region67: #{mlp_pallas.1} parent=55 // loop_body
                %v1316 = vld [vmem:[%s1314] sm:%s1218]
                %1317 = vst [vmem:[%s1315] sm:%s1218] %v1316
                %s1318 = sadd.s32 1, %s1313
                %p1319 = scmp.ge.s32.totalorder %s1318, %s1301
                %s1320 = scalar_select %p1319, 0, %s1318
                %s1321 = smul.u32 %s1320, 8
                %s1322 = smul.u32 %s1320, 8
                %s1323 = scalar_lea.vmem %s1304, %s1321 [#allocation2]
                %s1324 = scalar_lea.vmem %s1306, %s1322
              $region68: #{mlp_pallas.1} parent=55 // loop_footer
                %s1310 = sadd.s32 %s1308, 1
              $region69: #{mlp_pallas.1} parent=55 // loop_footer_branch
                %1307 = sbr.rel target = $region65
              $region70: #{mlp_pallas.1} parent=55 // loop_exit
                _
            $region56: #{mlp_pallas.1} parent=47 // pred_fallthru
              _
          $region48: #{mlp_pallas.1} parent=43 // pred_fallthru
            _
          %1435 = vnop
        $region44: #{mlp_pallas.1} parent=39 // pred_fallthru
          _
      $region40: #{mlp_pallas.1} parent=5 // pred_fallthru
        _
      %p1436 = scmp.le.s32.totalorder 2, %s11
      // Predicated region
      $region93: #{mlp_pallas.1} parent=5 // pred_check
        %p1437 = pneg %p1436
      $region94: #{mlp_pallas.1} parent=5 // pred_check_branch
        %1439 = sbr.rel (%p1437) target = $region96
      $region95: #{mlp_pallas.1} parent=5 // pred_region
        %s1440 = ssub.s32 %s11, 2
        // Predicated region
        $region97: #{mlp_pallas.1} parent=95 // pred_check
          %p1441 = pneg %p150
        $region98: #{mlp_pallas.1} parent=95 // pred_check_branch
          %1443 = sbr.rel (%p1441) target = $region100
        $region99: #{mlp_pallas.1} parent=95 // pred_region
          %s1444 = sand.u32 %s135, 1
          %s1445 = sand.u32 %s135, 1
          %s1446 = smul.addr %s1445, 256
          %s1447 = scalar_lea.vmem [#allocation2], %s1446
        $region100: #{mlp_pallas.1} parent=95 // pred_fallthru
          _
      $region96: #{mlp_pallas.1} parent=5 // pred_fallthru
        _
    $region6: #{mlp_pallas.1} parent=1 // loop_footer
      %s15 = sadd.s32 1, %s11
    $region7: #{mlp_pallas.1} parent=1 // loop_footer_branch
      %10 = sbr.rel target = $region3
    $region8: #{mlp_pallas.1} parent=1 // loop_exit
      _

</llo_original>
